<compile_context>
chip_gen: v5e
topology: v5e:2x2
jax: 0.10.0
libtpu: 0.0.40
codegen_flags: <defaults>
</compile_context>

<pallas_src>
import functools

import jax
import jax.numpy as jnp
from jax import lax
from jax.experimental import pallas as pl
from jax.experimental.pallas import tpu as pltpu

NEG_SLOPE = 1.0   # nn.LeakyReLU(True): True is the negative_slope positional arg -> 1.0
BN_EPS = 1e-5


def _round_up(x, m):
    return (x + m - 1) // m * m


def _divisors_desc(n):
    return [d for d in range(n, 0, -1) if n % d == 0]


def _vmem_budget():
    """(scoped vmem limit, per-step working-set budget), adapted to the TPU generation."""
    cap = 0
    try:
        info = pltpu.get_tpu_info()
        cap = int(getattr(info, "vmem_capacity_bytes", 0) or 0)
    except Exception:
        cap = 0
    if cap >= 100 * 1024 * 1024:                       # 128 MiB parts (v5e / v6e)
        return 64 * 1024 * 1024, 48 * 1024 * 1024
    return 32 * 1024 * 1024, 22 * 1024 * 1024          # v7x (64 MiB physical) / unknown


def _pick_tcout(cout_p, cin, kk, budget):
    """Largest multiple of 128 dividing cout_p whose per-tap weight block fits the budget."""
    best = min(cout_p, 128)
    d = 128
    while d <= cout_p:
        if cout_p % d == 0 and kk * cin * d * 2 <= budget:
            best = d
        d += 128
    return best


def _pick_tr(oh, ow, cin, tcout, fixed_bytes, budget, prefer_split):
    """Largest output-row tile (divisor of OH) whose working set fits the budget."""
    # y out block (2 bufs, bf16) + f32 acc, acc^2 and cast temps + per-tap lhs slice.
    per_row = ow * (tcout * (2 * 2 + 3 * 4) + cin * 4)
    legal = [d for d in _divisors_desc(oh) if d == oh or (d * ow) % 8 == 0]
    fits = [d for d in legal if fixed_bytes + d * per_row <= budget]
    if prefer_split:  # make sure there are >=2 grid blocks so v7x's 2nd TC has work
        split_fits = [d for d in fits if d <= max(oh // 2, 1)]
        if split_fits:
            return split_fits[0]
    if fits:
        return fits[0]
    return legal[-1]  # smallest legal tile; may exceed budget on extreme shapes


def _pick_ts(s, cout, cout_p, budget):
    """Spatial tile for the BN+activation pass (divisor of OH*OW, lane-dense when split)."""
    per_row = cout_p * 2 * 2 + cout_p * 4 * 2 + cout * 4 * 2
    legal = [d for d in _divisors_desc(s) if d == s or d % 128 == 0]
    fits = [d for d in legal if d * per_row <= budget]
    return fits[0] if fits else legal[-1]


# ---------------------------------------------------------------------------
# Kernel 1: tap-decomposed conv (bf16 operands, f32 MXU accumulation) fused with
# per-block partial BatchNorm statistics.  One (cout_block, image, row_block) step.
# ---------------------------------------------------------------------------
def _conv_stats_kernel(ph_ref, w_ref, y_ref, sum_ref, ssq_ref, *,
                       kh, kw, ow, tr, cin, nrb):
    # ph_ref : (4, Hp, Wp, Cin)     stride-2 phase-split padded input for one image (bf16)
    # w_ref  : (kh*kw, Cin, tcout)  per-tap weight matrices (bf16)
    # y_ref  : (1, tr*ow, tcout)    bf16 conv rows          sum/ssq: (1, 1, tcout) f32
    tcout = w_ref.shape[-1]
    r0 = 0 if nrb == 1 else pl.program_id(2) * tr
    acc = jnp.zeros((tr * ow, tcout), jnp.float32)
    for i in range(kh):
        for j in range(kw):
            sl = ph_ref[(i % 2) * 2 + (j % 2),
                        pl.ds(i // 2 + r0, tr),
                        pl.ds(j // 2, ow), :]                     # (tr, ow, cin), unit-stride
            acc = acc + jnp.dot(sl.reshape(tr * ow, cin), w_ref[i * kw + j],
                                preferred_element_type=jnp.float32)
    y_ref[0] = acc.astype(y_ref.dtype)
    sum_ref[0] = jnp.sum(acc, axis=0, keepdims=True)
    ssq_ref[0] = jnp.sum(acc * acc, axis=0, keepdims=True)


# ---------------------------------------------------------------------------
# Kernel 2: fused BatchNorm (pre-folded scale/bias) + LeakyReLU; writes only the
# real Cout channels (f32).
# ---------------------------------------------------------------------------
def _bn_act_kernel(y_ref, scale_ref, bias_ref, o_ref, *, cout):
    y = y_ref[0].astype(jnp.float32)                  # (ts, cout_p)
    out = y * scale_ref[...] + bias_ref[...]
    if NEG_SLOPE != 1.0:                              # identity when slope == 1.0
        out = jnp.where(out >= 0.0, out, NEG_SLOPE * out)
    o_ref[0] = out[:, :cout].astype(o_ref.dtype)


# ---------------------------------------------------------------------------
# Wrapper.
# ---------------------------------------------------------------------------
def down_block_forward(x_nchw, weight_oihw, gamma, beta, *, stride=2, pad=1):
    assert stride == 2, "DownBlock is fixed at stride 2"
    cout, cin, kh, kw = weight_oihw.shape
    n, _, h, w = x_nchw.shape
    oh = (h + 2 * pad - kh) // stride + 1
    ow = (w + 2 * pad - kw) // stride + 1
    m = n * oh * ow
    kk = kh * kw

    vmem_limit, budget = _vmem_budget()

    # ---- stride-2 phase split of the padded input (one cheap XLA repack pass;
    #      replaces the 4x-inflated im2col matrix of the previous version) ----
    hp = max(-(-(h + 2 * pad) // 2), (kh - 1) // 2 + oh)
    wp = max(-(-(w + 2 * pad) // 2), (kw - 1) // 2 + ow)
    x_nhwc = jnp.transpose(x_nchw, (0, 2, 3, 1)).astype(jnp.bfloat16)
    xp = jnp.pad(x_nhwc, ((0, 0), (pad, 2 * hp - h - pad), (pad, 2 * wp - w - pad), (0, 0)))
    phases = xp.reshape(n, hp, 2, wp, 2, cin).transpose(0, 2, 4, 1, 3, 5)
    phases = phases.reshape(n * 4, hp, wp, cin)       # row n*4 + a*2 + b == xp[:, 2r+a, 2c+b]

    # ---- per-tap weight matrices, channel-padded to a lane-dense multiple of 128 ----
    cout_p = _round_up(cout, 128)
    wtap = jnp.transpose(weight_oihw, (2, 3, 1, 0)).reshape(kk, cin, cout)
    wtap = jnp.pad(wtap, ((0, 0), (0, 0), (0, cout_p - cout))).astype(jnp.bfloat16)

    # ---- tiling ----
    tcout = _pick_tcout(cout_p, cin, kk, budget // 3)
    n_co = cout_p // tcout
    w_bufs = 1 if n_co == 1 else 2
    fixed = 2 * (4 * hp * wp * cin * 2) + w_bufs * (kk * cin * tcout * 2)
    tr = _pick_tr(oh, ow, cin, tcout, fixed, budget, prefer_split=(n * n_co == 1))
    nrb = oh // tr

    def _w_index(co, ni, rb):
        return (0, 0, co)

    if n_co == 1:
        try:    # grid-invariant weight block: single-buffer it to reclaim VMEM
            w_spec = pl.BlockSpec((kk, cin, tcout), _w_index, pipeline_mode=pl.Buffered(1))
        except TypeError:   # older jax without pipeline_mode on BlockSpec
            w_spec = pl.BlockSpec((kk, cin, tcout), _w_index)
    else:
        w_spec = pl.BlockSpec((kk, cin, tcout), _w_index)

    conv_kernel = functools.partial(_conv_stats_kernel, kh=kh, kw=kw, ow=ow,
                                    tr=tr, cin=cin, nrb=nrb)
    y, psum, pssq = pl.pallas_call(
        conv_kernel,
        out_shape=(
            jax.ShapeDtypeStruct((n, oh * ow, cout_p), jnp.bfloat16),
            jax.ShapeDtypeStruct((n * nrb, 1, cout_p), jnp.float32),
            jax.ShapeDtypeStruct((n * nrb, 1, cout_p), jnp.float32),
        ),
        grid_spec=pltpu.PrefetchScalarGridSpec(
            num_scalar_prefetch=0,
            grid=(n_co, n, nrb),
            in_specs=[
                pl.BlockSpec((4, hp, wp, cin), lambda co, ni, rb: (ni, 0, 0, 0)),
                w_spec,
            ],
            out_specs=(
                pl.BlockSpec((1, tr * ow, tcout), lambda co, ni, rb: (ni, rb, co)),
                pl.BlockSpec((1, 1, tcout), lambda co, ni, rb: (ni * nrb + rb, 0, co)),
                pl.BlockSpec((1, 1, tcout), lambda co, ni, rb: (ni * nrb + rb, 0, co)),
            ),
        ),
        compiler_params=pltpu.CompilerParams(
            dimension_semantics=("parallel", "parallel", "parallel"),
            vmem_limit_bytes=vmem_limit,
        ),
    )(phases, wtap)

    # ---- tiny per-channel scalar math in JAX: BatchNorm training statistics over the
    #      true N*OH*OW rows (taken from the f32 accumulator), folded into (scale, bias).
    gamma_p = jnp.pad(gamma.astype(jnp.float32), (0, cout_p - cout)).reshape(1, cout_p)
    beta_p = jnp.pad(beta.astype(jnp.float32), (0, cout_p - cout)).reshape(1, cout_p)
    col_sum = jnp.sum(psum, axis=0)                    # (1, cout_p)
    col_ssq = jnp.sum(pssq, axis=0)
    mean = col_sum / m
    var = jnp.maximum(col_ssq / m - mean * mean, 0.0)
    inv = lax.rsqrt(var + BN_EPS)
    scale = gamma_p * inv
    bias = beta_p - mean * scale

    # ---- kernel 2: BN + LeakyReLU, only real channels written ----
    s = oh * ow
    ts = _pick_ts(s, cout, cout_p, budget)
    nsb = s // ts
    bn_kernel = functools.partial(_bn_act_kernel, cout=cout)
    out_nhwc = pl.pallas_call(
        bn_kernel,
        out_shape=jax.ShapeDtypeStruct((n, s, cout), jnp.float32),
        grid_spec=pltpu.PrefetchScalarGridSpec(
            num_scalar_prefetch=0,
            grid=(n, nsb),
            in_specs=[
                pl.BlockSpec((1, ts, cout_p), lambda ni, sb: (ni, sb, 0)),
                pl.BlockSpec((1, cout_p), lambda ni, sb: (0, 0)),
                pl.BlockSpec((1, cout_p), lambda ni, sb: (0, 0)),
            ],
            out_specs=pl.BlockSpec((1, ts, cout), lambda ni, sb: (ni, sb, 0)),
        ),
        compiler_params=pltpu.CompilerParams(
            dimension_semantics=("parallel", "parallel"),
            vmem_limit_bytes=vmem_limit,
        ),
    )(y, scale, bias)

    out = out_nhwc.reshape(n, oh, ow, cout)
    return jnp.transpose(out, (0, 3, 1, 2))            # NCHW to match the PyTorch module


# ---------------------------------------------------------------------------
# Pure-JAX references (for correctness assertion).
# ---------------------------------------------------------------------------
def _reference(x, w, gamma, beta, *, conv_dtype=jnp.float32, quantize_y=False):
    y = lax.conv_general_dilated(
        x.astype(conv_dtype), w.astype(conv_dtype),
        window_strides=(2, 2), padding=((1, 1), (1, 1)),
        dimension_numbers=("NCHW", "OIHW", "NCHW"),
        preferred_element_type=jnp.float32)
    mean = jnp.mean(y, axis=(0, 2, 3), keepdims=True)
    var = jnp.maximum(jnp.mean(y * y, axis=(0, 2, 3), keepdims=True) - mean * mean, 0.0)
    if quantize_y:
        y = y.astype(jnp.bfloat16).astype(jnp.float32)
    yhat = (y - mean) * lax.rsqrt(var + BN_EPS)
    out = yhat * gamma.reshape(1, -1, 1, 1) + beta.reshape(1, -1, 1, 1)
    if NEG_SLOPE != 1.0:
        out = jnp.where(out >= 0.0, out, NEG_SLOPE * out)
    return out


if __name__ == "__main__":
    key = jax.random.PRNGKey(0)
    kx, kw_, kg, kb = jax.random.split(key, 4)

    N, CIN, COUT, H, W, KSIZE = 2, 4, 8, 16, 16, 4

    x = jax.random.normal(kx, (N, CIN, H, W), dtype=jnp.float32)
    # Conv2d(in, out, kernel_size=4, stride=2, padding=1, bias=False) weight
    weight = jax.random.normal(kw_, (COUT, CIN, KSIZE, KSIZE), dtype=jnp.float32) * 0.1
    # BatchNorm2d affine params (randomized deterministically to exercise the math)
    gamma = 1.0 + 0.1 * jax.random.normal(kg, (COUT,), dtype=jnp.float32)
    beta = 0.1 * jax.random.normal(kb, (COUT,), dtype=jnp.float32)

    out = jax.block_until_ready(down_block_forward(x, weight, gamma, beta))
    assert out.shape == (N, COUT, H // 2, W // 2), out.shape

    # Tight check against a bf16-matched reference (same precision pipeline).
    ref_bf16 = jax.block_until_ready(
        _reference(x, weight, gamma, beta, conv_dtype=jnp.bfloat16, quantize_y=True))
    err_tight = float(jnp.max(jnp.abs(out - ref_bf16)))
    assert jnp.allclose(out, ref_bf16, atol=3e-2, rtol=3e-2), err_tight

    # Loose sanity check against the full-f32 reference (bf16 rounding only).
    ref_f32 = jax.block_until_ready(_reference(x, weight, gamma, beta))
    err_loose = float(jnp.max(jnp.abs(out - ref_f32)))
    assert jnp.allclose(out, ref_f32, atol=1e-1, rtol=1e-1), err_loose

    print("KERNEL_OK")
</pallas_src>

<mosaic_0001>
module attributes {stable_mosaic.version = 11 : i64} {
  func.func @_conv_stats_kernel(%arg0: i32, %arg1: i32, %arg2: i32, %arg3: memref<4x9x9x4xbf16, #tpu.memory_space<vmem>>, %arg4: memref<16x4x128xbf16, #tpu.memory_space<vmem>>, %arg5: memref<1x64x128xbf16, #tpu.memory_space<vmem>>, %arg6: memref<1x1x128xf32, #tpu.memory_space<vmem>>, %arg7: memref<1x1x128xf32, #tpu.memory_space<vmem>>) attributes {dimension_semantics = [#tpu.dimension_semantics<parallel>, #tpu.dimension_semantics<parallel>, #tpu.dimension_semantics<parallel>], iteration_bounds = array<i64: 1, 2, 1>, scalar_prefetch = 0 : i64, scratch_operands = 0 : i64, tpu.core_type = #tpu.core_type<tc>, window_params = [{transform_indices = @transform_0, window_bounds = array<i64: 4, 9, 9, 4>}, {pipeline_mode = #tpu.pipeline_mode<synchronous>, transform_indices = @transform_1, window_bounds = array<i64: 16, 4, 128>}, {transform_indices = @transform_2, window_bounds = array<i64: 1, 64, 128>}, {transform_indices = @transform_3, window_bounds = array<i64: 1, 1, 128>}, {transform_indices = @transform_4, window_bounds = array<i64: 1, 1, 128>}]} {
    %cst = arith.constant 0.000000e+00 : f32
    %0 = vector.broadcast %cst : f32 to vector<64x128xf32>
    %c0 = arith.constant 0 : index
    %c0_0 = arith.constant 0 : index
    %c0_1 = arith.constant 0 : index
    %c0_2 = arith.constant 0 : index
    %1 = vector.load %arg3[%c0, %c0_0, %c0_1, %c0_2] : memref<4x9x9x4xbf16, #tpu.memory_space<vmem>>, vector<1x8x8x4xbf16>
    %2 = vector.shape_cast %1 : vector<1x8x8x4xbf16> to vector<8x8x4xbf16>
    %3 = vector.shape_cast %2 : vector<8x8x4xbf16> to vector<64x4xbf16>
    %c0_3 = arith.constant 0 : index
    %c0_4 = arith.constant 0 : index
    %c0_5 = arith.constant 0 : index
    %4 = vector.load %arg4[%c0_3, %c0_4, %c0_5] : memref<16x4x128xbf16, #tpu.memory_space<vmem>>, vector<1x4x128xbf16>
    %5 = vector.shape_cast %4 : vector<1x4x128xbf16> to vector<4x128xbf16>
    %cst_6 = arith.constant dense<0.000000e+00> : vector<64x128xf32>
    %6 = tpu.matmul %3, %5, %cst_6 {dimension_numbers = #tpu.dot_dimension_numbers<[1], [0], [0], [1], [0, 0, 1, 1], [], []>} : vector<64x4xbf16>, vector<4x128xbf16>, vector<64x128xf32> -> vector<64x128xf32>
    %7 = arith.addf %0, %6 : vector<64x128xf32>
    %c1 = arith.constant 1 : index
    %c0_7 = arith.constant 0 : index
    %c0_8 = arith.constant 0 : index
    %c0_9 = arith.constant 0 : index
    %8 = vector.load %arg3[%c1, %c0_7, %c0_8, %c0_9] : memref<4x9x9x4xbf16, #tpu.memory_space<vmem>>, vector<1x8x8x4xbf16>
    %9 = vector.shape_cast %8 : vector<1x8x8x4xbf16> to vector<8x8x4xbf16>
    %10 = vector.shape_cast %9 : vector<8x8x4xbf16> to vector<64x4xbf16>
    %c1_10 = arith.constant 1 : index
    %c0_11 = arith.constant 0 : index
    %c0_12 = arith.constant 0 : index
    %11 = vector.load %arg4[%c1_10, %c0_11, %c0_12] : memref<16x4x128xbf16, #tpu.memory_space<vmem>>, vector<1x4x128xbf16>
    %12 = vector.shape_cast %11 : vector<1x4x128xbf16> to vector<4x128xbf16>
    %cst_13 = arith.constant dense<0.000000e+00> : vector<64x128xf32>
    %13 = tpu.matmul %10, %12, %cst_13 {dimension_numbers = #tpu.dot_dimension_numbers<[1], [0], [0], [1], [0, 0, 1, 1], [], []>} : vector<64x4xbf16>, vector<4x128xbf16>, vector<64x128xf32> -> vector<64x128xf32>
    %14 = arith.addf %7, %13 : vector<64x128xf32>
    %c0_14 = arith.constant 0 : index
    %c0_15 = arith.constant 0 : index
    %c1_16 = arith.constant 1 : index
    %c0_17 = arith.constant 0 : index
    %15 = vector.load %arg3[%c0_14, %c0_15, %c1_16, %c0_17] : memref<4x9x9x4xbf16, #tpu.memory_space<vmem>>, vector<1x8x8x4xbf16>
    %16 = vector.shape_cast %15 : vector<1x8x8x4xbf16> to vector<8x8x4xbf16>
    %17 = vector.shape_cast %16 : vector<8x8x4xbf16> to vector<64x4xbf16>
    %c2 = arith.constant 2 : index
    %c0_18 = arith.constant 0 : index
    %c0_19 = arith.constant 0 : index
    %18 = vector.load %arg4[%c2, %c0_18, %c0_19] : memref<16x4x128xbf16, #tpu.memory_space<vmem>>, vector<1x4x128xbf16>
    %19 = vector.shape_cast %18 : vector<1x4x128xbf16> to vector<4x128xbf16>
    %cst_20 = arith.constant dense<0.000000e+00> : vector<64x128xf32>
    %20 = tpu.matmul %17, %19, %cst_20 {dimension_numbers = #tpu.dot_dimension_numbers<[1], [0], [0], [1], [0, 0, 1, 1], [], []>} : vector<64x4xbf16>, vector<4x128xbf16>, vector<64x128xf32> -> vector<64x128xf32>
    %21 = arith.addf %14, %20 : vector<64x128xf32>
    %c1_21 = arith.constant 1 : index
    %c0_22 = arith.constant 0 : index
    %c1_23 = arith.constant 1 : index
    %c0_24 = arith.constant 0 : index
    %22 = vector.load %arg3[%c1_21, %c0_22, %c1_23, %c0_24] : memref<4x9x9x4xbf16, #tpu.memory_space<vmem>>, vector<1x8x8x4xbf16>
    %23 = vector.shape_cast %22 : vector<1x8x8x4xbf16> to vector<8x8x4xbf16>
    %24 = vector.shape_cast %23 : vector<8x8x4xbf16> to vector<64x4xbf16>
    %c3 = arith.constant 3 : index
    %c0_25 = arith.constant 0 : index
    %c0_26 = arith.constant 0 : index
    %25 = vector.load %arg4[%c3, %c0_25, %c0_26] : memref<16x4x128xbf16, #tpu.memory_space<vmem>>, vector<1x4x128xbf16>
    %26 = vector.shape_cast %25 : vector<1x4x128xbf16> to vector<4x128xbf16>
    %cst_27 = arith.constant dense<0.000000e+00> : vector<64x128xf32>
    %27 = tpu.matmul %24, %26, %cst_27 {dimension_numbers = #tpu.dot_dimension_numbers<[1], [0], [0], [1], [0, 0, 1, 1], [], []>} : vector<64x4xbf16>, vector<4x128xbf16>, vector<64x128xf32> -> vector<64x128xf32>
    %28 = arith.addf %21, %27 : vector<64x128xf32>
    %c2_28 = arith.constant 2 : index
    %c0_29 = arith.constant 0 : index
    %c0_30 = arith.constant 0 : index
    %c0_31 = arith.constant 0 : index
    %29 = vector.load %arg3[%c2_28, %c0_29, %c0_30, %c0_31] : memref<4x9x9x4xbf16, #tpu.memory_space<vmem>>, vector<1x8x8x4xbf16>
    %30 = vector.shape_cast %29 : vector<1x8x8x4xbf16> to vector<8x8x4xbf16>
    %31 = vector.shape_cast %30 : vector<8x8x4xbf16> to vector<64x4xbf16>
    %c4 = arith.constant 4 : index
    %c0_32 = arith.constant 0 : index
    %c0_33 = arith.constant 0 : index
    %32 = vector.load %arg4[%c4, %c0_32, %c0_33] : memref<16x4x128xbf16, #tpu.memory_space<vmem>>, vector<1x4x128xbf16>
    %33 = vector.shape_cast %32 : vector<1x4x128xbf16> to vector<4x128xbf16>
    %cst_34 = arith.constant dense<0.000000e+00> : vector<64x128xf32>
    %34 = tpu.matmul %31, %33, %cst_34 {dimension_numbers = #tpu.dot_dimension_numbers<[1], [0], [0], [1], [0, 0, 1, 1], [], []>} : vector<64x4xbf16>, vector<4x128xbf16>, vector<64x128xf32> -> vector<64x128xf32>
    %35 = arith.addf %28, %34 : vector<64x128xf32>
    %c3_35 = arith.constant 3 : index
    %c0_36 = arith.constant 0 : index
    %c0_37 = arith.constant 0 : index
    %c0_38 = arith.constant 0 : index
    %36 = vector.load %arg3[%c3_35, %c0_36, %c0_37, %c0_38] : memref<4x9x9x4xbf16, #tpu.memory_space<vmem>>, vector<1x8x8x4xbf16>
    %37 = vector.shape_cast %36 : vector<1x8x8x4xbf16> to vector<8x8x4xbf16>
    %38 = vector.shape_cast %37 : vector<8x8x4xbf16> to vector<64x4xbf16>
    %c5 = arith.constant 5 : index
    %c0_39 = arith.constant 0 : index
    %c0_40 = arith.constant 0 : index
    %39 = vector.load %arg4[%c5, %c0_39, %c0_40] : memref<16x4x128xbf16, #tpu.memory_space<vmem>>, vector<1x4x128xbf16>
    %40 = vector.shape_cast %39 : vector<1x4x128xbf16> to vector<4x128xbf16>
    %cst_41 = arith.constant dense<0.000000e+00> : vector<64x128xf32>
    %41 = tpu.matmul %38, %40, %cst_41 {dimension_numbers = #tpu.dot_dimension_numbers<[1], [0], [0], [1], [0, 0, 1, 1], [], []>} : vector<64x4xbf16>, vector<4x128xbf16>, vector<64x128xf32> -> vector<64x128xf32>
    %42 = arith.addf %35, %41 : vector<64x128xf32>
    %c2_42 = arith.constant 2 : index
    %c0_43 = arith.constant 0 : index
    %c1_44 = arith.constant 1 : index
    %c0_45 = arith.constant 0 : index
    %43 = vector.load %arg3[%c2_42, %c0_43, %c1_44, %c0_45] : memref<4x9x9x4xbf16, #tpu.memory_space<vmem>>, vector<1x8x8x4xbf16>
    %44 = vector.shape_cast %43 : vector<1x8x8x4xbf16> to vector<8x8x4xbf16>
    %45 = vector.shape_cast %44 : vector<8x8x4xbf16> to vector<64x4xbf16>
    %c6 = arith.constant 6 : index
    %c0_46 = arith.constant 0 : index
    %c0_47 = arith.constant 0 : index
    %46 = vector.load %arg4[%c6, %c0_46, %c0_47] : memref<16x4x128xbf16, #tpu.memory_space<vmem>>, vector<1x4x128xbf16>
    %47 = vector.shape_cast %46 : vector<1x4x128xbf16> to vector<4x128xbf16>
    %cst_48 = arith.constant dense<0.000000e+00> : vector<64x128xf32>
    %48 = tpu.matmul %45, %47, %cst_48 {dimension_numbers = #tpu.dot_dimension_numbers<[1], [0], [0], [1], [0, 0, 1, 1], [], []>} : vector<64x4xbf16>, vector<4x128xbf16>, vector<64x128xf32> -> vector<64x128xf32>
    %49 = arith.addf %42, %48 : vector<64x128xf32>
    %c3_49 = arith.constant 3 : index
    %c0_50 = arith.constant 0 : index
    %c1_51 = arith.constant 1 : index
    %c0_52 = arith.constant 0 : index
    %50 = vector.load %arg3[%c3_49, %c0_50, %c1_51, %c0_52] : memref<4x9x9x4xbf16, #tpu.memory_space<vmem>>, vector<1x8x8x4xbf16>
    %51 = vector.shape_cast %50 : vector<1x8x8x4xbf16> to vector<8x8x4xbf16>
    %52 = vector.shape_cast %51 : vector<8x8x4xbf16> to vector<64x4xbf16>
    %c7 = arith.constant 7 : index
    %c0_53 = arith.constant 0 : index
    %c0_54 = arith.constant 0 : index
    %53 = vector.load %arg4[%c7, %c0_53, %c0_54] : memref<16x4x128xbf16, #tpu.memory_space<vmem>>, vector<1x4x128xbf16>
    %54 = vector.shape_cast %53 : vector<1x4x128xbf16> to vector<4x128xbf16>
    %cst_55 = arith.constant dense<0.000000e+00> : vector<64x128xf32>
    %55 = tpu.matmul %52, %54, %cst_55 {dimension_numbers = #tpu.dot_dimension_numbers<[1], [0], [0], [1], [0, 0, 1, 1], [], []>} : vector<64x4xbf16>, vector<4x128xbf16>, vector<64x128xf32> -> vector<64x128xf32>
    %56 = arith.addf %49, %55 : vector<64x128xf32>
    %c0_56 = arith.constant 0 : index
    %c1_57 = arith.constant 1 : index
    %c0_58 = arith.constant 0 : index
    %c0_59 = arith.constant 0 : index
    %57 = vector.load %arg3[%c0_56, %c1_57, %c0_58, %c0_59] : memref<4x9x9x4xbf16, #tpu.memory_space<vmem>>, vector<1x8x8x4xbf16>
    %58 = vector.shape_cast %57 : vector<1x8x8x4xbf16> to vector<8x8x4xbf16>
    %59 = vector.shape_cast %58 : vector<8x8x4xbf16> to vector<64x4xbf16>
    %c8 = arith.constant 8 : index
    %c0_60 = arith.constant 0 : index
    %c0_61 = arith.constant 0 : index
    %60 = vector.load %arg4[%c8, %c0_60, %c0_61] : memref<16x4x128xbf16, #tpu.memory_space<vmem>>, vector<1x4x128xbf16>
    %61 = vector.shape_cast %60 : vector<1x4x128xbf16> to vector<4x128xbf16>
    %cst_62 = arith.constant dense<0.000000e+00> : vector<64x128xf32>
    %62 = tpu.matmul %59, %61, %cst_62 {dimension_numbers = #tpu.dot_dimension_numbers<[1], [0], [0], [1], [0, 0, 1, 1], [], []>} : vector<64x4xbf16>, vector<4x128xbf16>, vector<64x128xf32> -> vector<64x128xf32>
    %63 = arith.addf %56, %62 : vector<64x128xf32>
    %c1_63 = arith.constant 1 : index
    %c1_64 = arith.constant 1 : index
    %c0_65 = arith.constant 0 : index
    %c0_66 = arith.constant 0 : index
    %64 = vector.load %arg3[%c1_63, %c1_64, %c0_65, %c0_66] : memref<4x9x9x4xbf16, #tpu.memory_space<vmem>>, vector<1x8x8x4xbf16>
    %65 = vector.shape_cast %64 : vector<1x8x8x4xbf16> to vector<8x8x4xbf16>
    %66 = vector.shape_cast %65 : vector<8x8x4xbf16> to vector<64x4xbf16>
    %c9 = arith.constant 9 : index
    %c0_67 = arith.constant 0 : index
    %c0_68 = arith.constant 0 : index
    %67 = vector.load %arg4[%c9, %c0_67, %c0_68] : memref<16x4x128xbf16, #tpu.memory_space<vmem>>, vector<1x4x128xbf16>
    %68 = vector.shape_cast %67 : vector<1x4x128xbf16> to vector<4x128xbf16>
    %cst_69 = arith.constant dense<0.000000e+00> : vector<64x128xf32>
    %69 = tpu.matmul %66, %68, %cst_69 {dimension_numbers = #tpu.dot_dimension_numbers<[1], [0], [0], [1], [0, 0, 1, 1], [], []>} : vector<64x4xbf16>, vector<4x128xbf16>, vector<64x128xf32> -> vector<64x128xf32>
    %70 = arith.addf %63, %69 : vector<64x128xf32>
    %c0_70 = arith.constant 0 : index
    %c1_71 = arith.constant 1 : index
    %c1_72 = arith.constant 1 : index
    %c0_73 = arith.constant 0 : index
    %71 = vector.load %arg3[%c0_70, %c1_71, %c1_72, %c0_73] : memref<4x9x9x4xbf16, #tpu.memory_space<vmem>>, vector<1x8x8x4xbf16>
    %72 = vector.shape_cast %71 : vector<1x8x8x4xbf16> to vector<8x8x4xbf16>
    %73 = vector.shape_cast %72 : vector<8x8x4xbf16> to vector<64x4xbf16>
    %c10 = arith.constant 10 : index
    %c0_74 = arith.constant 0 : index
    %c0_75 = arith.constant 0 : index
    %74 = vector.load %arg4[%c10, %c0_74, %c0_75] : memref<16x4x128xbf16, #tpu.memory_space<vmem>>, vector<1x4x128xbf16>
    %75 = vector.shape_cast %74 : vector<1x4x128xbf16> to vector<4x128xbf16>
    %cst_76 = arith.constant dense<0.000000e+00> : vector<64x128xf32>
    %76 = tpu.matmul %73, %75, %cst_76 {dimension_numbers = #tpu.dot_dimension_numbers<[1], [0], [0], [1], [0, 0, 1, 1], [], []>} : vector<64x4xbf16>, vector<4x128xbf16>, vector<64x128xf32> -> vector<64x128xf32>
    %77 = arith.addf %70, %76 : vector<64x128xf32>
    %c1_77 = arith.constant 1 : index
    %c1_78 = arith.constant 1 : index
    %c1_79 = arith.constant 1 : index
    %c0_80 = arith.constant 0 : index
    %78 = vector.load %arg3[%c1_77, %c1_78, %c1_79, %c0_80] : memref<4x9x9x4xbf16, #tpu.memory_space<vmem>>, vector<1x8x8x4xbf16>
    %79 = vector.shape_cast %78 : vector<1x8x8x4xbf16> to vector<8x8x4xbf16>
    %80 = vector.shape_cast %79 : vector<8x8x4xbf16> to vector<64x4xbf16>
    %c11 = arith.constant 11 : index
    %c0_81 = arith.constant 0 : index
    %c0_82 = arith.constant 0 : index
    %81 = vector.load %arg4[%c11, %c0_81, %c0_82] : memref<16x4x128xbf16, #tpu.memory_space<vmem>>, vector<1x4x128xbf16>
    %82 = vector.shape_cast %81 : vector<1x4x128xbf16> to vector<4x128xbf16>
    %cst_83 = arith.constant dense<0.000000e+00> : vector<64x128xf32>
    %83 = tpu.matmul %80, %82, %cst_83 {dimension_numbers = #tpu.dot_dimension_numbers<[1], [0], [0], [1], [0, 0, 1, 1], [], []>} : vector<64x4xbf16>, vector<4x128xbf16>, vector<64x128xf32> -> vector<64x128xf32>
    %84 = arith.addf %77, %83 : vector<64x128xf32>
    %c2_84 = arith.constant 2 : index
    %c1_85 = arith.constant 1 : index
    %c0_86 = arith.constant 0 : index
    %c0_87 = arith.constant 0 : index
    %85 = vector.load %arg3[%c2_84, %c1_85, %c0_86, %c0_87] : memref<4x9x9x4xbf16, #tpu.memory_space<vmem>>, vector<1x8x8x4xbf16>
    %86 = vector.shape_cast %85 : vector<1x8x8x4xbf16> to vector<8x8x4xbf16>
    %87 = vector.shape_cast %86 : vector<8x8x4xbf16> to vector<64x4xbf16>
    %c12 = arith.constant 12 : index
    %c0_88 = arith.constant 0 : index
    %c0_89 = arith.constant 0 : index
    %88 = vector.load %arg4[%c12, %c0_88, %c0_89] : memref<16x4x128xbf16, #tpu.memory_space<vmem>>, vector<1x4x128xbf16>
    %89 = vector.shape_cast %88 : vector<1x4x128xbf16> to vector<4x128xbf16>
    %cst_90 = arith.constant dense<0.000000e+00> : vector<64x128xf32>
    %90 = tpu.matmul %87, %89, %cst_90 {dimension_numbers = #tpu.dot_dimension_numbers<[1], [0], [0], [1], [0, 0, 1, 1], [], []>} : vector<64x4xbf16>, vector<4x128xbf16>, vector<64x128xf32> -> vector<64x128xf32>
    %91 = arith.addf %84, %90 : vector<64x128xf32>
    %c3_91 = arith.constant 3 : index
    %c1_92 = arith.constant 1 : index
    %c0_93 = arith.constant 0 : index
    %c0_94 = arith.constant 0 : index
    %92 = vector.load %arg3[%c3_91, %c1_92, %c0_93, %c0_94] : memref<4x9x9x4xbf16, #tpu.memory_space<vmem>>, vector<1x8x8x4xbf16>
    %93 = vector.shape_cast %92 : vector<1x8x8x4xbf16> to vector<8x8x4xbf16>
    %94 = vector.shape_cast %93 : vector<8x8x4xbf16> to vector<64x4xbf16>
    %c13 = arith.constant 13 : index
    %c0_95 = arith.constant 0 : index
    %c0_96 = arith.constant 0 : index
    %95 = vector.load %arg4[%c13, %c0_95, %c0_96] : memref<16x4x128xbf16, #tpu.memory_space<vmem>>, vector<1x4x128xbf16>
    %96 = vector.shape_cast %95 : vector<1x4x128xbf16> to vector<4x128xbf16>
    %cst_97 = arith.constant dense<0.000000e+00> : vector<64x128xf32>
    %97 = tpu.matmul %94, %96, %cst_97 {dimension_numbers = #tpu.dot_dimension_numbers<[1], [0], [0], [1], [0, 0, 1, 1], [], []>} : vector<64x4xbf16>, vector<4x128xbf16>, vector<64x128xf32> -> vector<64x128xf32>
    %98 = arith.addf %91, %97 : vector<64x128xf32>
    %c2_98 = arith.constant 2 : index
    %c1_99 = arith.constant 1 : index
    %c1_100 = arith.constant 1 : index
    %c0_101 = arith.constant 0 : index
    %99 = vector.load %arg3[%c2_98, %c1_99, %c1_100, %c0_101] : memref<4x9x9x4xbf16, #tpu.memory_space<vmem>>, vector<1x8x8x4xbf16>
    %100 = vector.shape_cast %99 : vector<1x8x8x4xbf16> to vector<8x8x4xbf16>
    %101 = vector.shape_cast %100 : vector<8x8x4xbf16> to vector<64x4xbf16>
    %c14 = arith.constant 14 : index
    %c0_102 = arith.constant 0 : index
    %c0_103 = arith.constant 0 : index
    %102 = vector.load %arg4[%c14, %c0_102, %c0_103] : memref<16x4x128xbf16, #tpu.memory_space<vmem>>, vector<1x4x128xbf16>
    %103 = vector.shape_cast %102 : vector<1x4x128xbf16> to vector<4x128xbf16>
    %cst_104 = arith.constant dense<0.000000e+00> : vector<64x128xf32>
    %104 = tpu.matmul %101, %103, %cst_104 {dimension_numbers = #tpu.dot_dimension_numbers<[1], [0], [0], [1], [0, 0, 1, 1], [], []>} : vector<64x4xbf16>, vector<4x128xbf16>, vector<64x128xf32> -> vector<64x128xf32>
    %105 = arith.addf %98, %104 : vector<64x128xf32>
    %c3_105 = arith.constant 3 : index
    %c1_106 = arith.constant 1 : index
    %c1_107 = arith.constant 1 : index
    %c0_108 = arith.constant 0 : index
    %106 = vector.load %arg3[%c3_105, %c1_106, %c1_107, %c0_108] : memref<4x9x9x4xbf16, #tpu.memory_space<vmem>>, vector<1x8x8x4xbf16>
    %107 = vector.shape_cast %106 : vector<1x8x8x4xbf16> to vector<8x8x4xbf16>
    %108 = vector.shape_cast %107 : vector<8x8x4xbf16> to vector<64x4xbf16>
    %c15 = arith.constant 15 : index
    %c0_109 = arith.constant 0 : index
    %c0_110 = arith.constant 0 : index
    %109 = vector.load %arg4[%c15, %c0_109, %c0_110] : memref<16x4x128xbf16, #tpu.memory_space<vmem>>, vector<1x4x128xbf16>
    %110 = vector.shape_cast %109 : vector<1x4x128xbf16> to vector<4x128xbf16>
    %cst_111 = arith.constant dense<0.000000e+00> : vector<64x128xf32>
    %111 = tpu.matmul %108, %110, %cst_111 {dimension_numbers = #tpu.dot_dimension_numbers<[1], [0], [0], [1], [0, 0, 1, 1], [], []>} : vector<64x4xbf16>, vector<4x128xbf16>, vector<64x128xf32> -> vector<64x128xf32>
    %112 = arith.addf %105, %111 : vector<64x128xf32>
    %113 = arith.truncf %112 : vector<64x128xf32> to vector<64x128xbf16>
    %c0_112 = arith.constant 0 : index
    %c0_113 = arith.constant 0 : index
    %c0_114 = arith.constant 0 : index
    %114 = vector.load %arg5[%c0_112, %c0_113, %c0_114] : memref<1x64x128xbf16, #tpu.memory_space<vmem>>, vector<1x64x128xbf16>
    %115 = vector.shape_cast %114 : vector<1x64x128xbf16> to vector<64x128xbf16>
    %116 = vector.shape_cast %113 : vector<64x128xbf16> to vector<1x64x128xbf16>
    tpu.vector_store %arg5[%c0_112, %c0_113, %c0_114], %116 {strides = array<i32>} : memref<1x64x128xbf16, #tpu.memory_space<vmem>>, vector<1x64x128xbf16>,
    %cst_115 = arith.constant dense<0.000000e+00> : vector<128xf32>
    %117 = vector.multi_reduction <add>, %112, %cst_115 [0] : vector<64x128xf32> to vector<128xf32>
    %118 = vector.shape_cast %117 : vector<128xf32> to vector<1x128xf32>
    %c0_116 = arith.constant 0 : index
    %c0_117 = arith.constant 0 : index
    %c0_118 = arith.constant 0 : index
    %119 = vector.load %arg6[%c0_116, %c0_117, %c0_118] : memref<1x1x128xf32, #tpu.memory_space<vmem>>, vector<1x1x128xf32>
    %120 = vector.shape_cast %119 : vector<1x1x128xf32> to vector<1x128xf32>
    %121 = vector.shape_cast %118 : vector<1x128xf32> to vector<1x1x128xf32>
    tpu.vector_store %arg6[%c0_116, %c0_117, %c0_118], %121 {strides = array<i32>} : memref<1x1x128xf32, #tpu.memory_space<vmem>>, vector<1x1x128xf32>,
    %122 = arith.mulf %112, %112 : vector<64x128xf32>
    %cst_119 = arith.constant dense<0.000000e+00> : vector<128xf32>
    %123 = vector.multi_reduction <add>, %122, %cst_119 [0] : vector<64x128xf32> to vector<128xf32>
    %124 = vector.shape_cast %123 : vector<128xf32> to vector<1x128xf32>
    %c0_120 = arith.constant 0 : index
    %c0_121 = arith.constant 0 : index
    %c0_122 = arith.constant 0 : index
    %125 = vector.load %arg7[%c0_120, %c0_121, %c0_122] : memref<1x1x128xf32, #tpu.memory_space<vmem>>, vector<1x1x128xf32>
    %126 = vector.shape_cast %125 : vector<1x1x128xf32> to vector<1x128xf32>
    %127 = vector.shape_cast %124 : vector<1x128xf32> to vector<1x1x128xf32>
    tpu.vector_store %arg7[%c0_120, %c0_121, %c0_122], %127 {strides = array<i32>} : memref<1x1x128xf32, #tpu.memory_space<vmem>>, vector<1x1x128xf32>,
    return
  }
  func.func @transform_0(%arg0: i32, %arg1: i32, %arg2: i32) -> (i32, i32, i32, i32) {
    %c0_i32 = arith.constant 0 : i32
    %c0_i32_0 = arith.constant 0 : i32
    %c0_i32_1 = arith.constant 0 : i32
    %c0_i32_2 = arith.constant 0 : i32
    return %arg1, %c0_i32, %c0_i32_0, %c0_i32_1 : i32, i32, i32, i32
  }
  func.func @transform_1(%arg0: i32, %arg1: i32, %arg2: i32) -> (i32, i32, i32) {
    %c0_i32 = arith.constant 0 : i32
    %c0_i32_0 = arith.constant 0 : i32
    %c0_i32_1 = arith.constant 0 : i32
    return %c0_i32, %c0_i32_0, %arg0 : i32, i32, i32
  }
  func.func @transform_2(%arg0: i32, %arg1: i32, %arg2: i32) -> (i32, i32, i32) {
    %c0_i32 = arith.constant 0 : i32
    return %arg1, %arg2, %arg0 : i32, i32, i32
  }
  func.func @transform_3(%arg0: i32, %arg1: i32, %arg2: i32) -> (i32, i32, i32) {
    %c1_i32 = arith.constant 1 : i32
    %0 = arith.muli %arg1, %c1_i32 : i32
    %1 = arith.addi %0, %arg2 : i32
    %c0_i32 = arith.constant 0 : i32
    %c0_i32_0 = arith.constant 0 : i32
    return %1, %c0_i32, %arg0 : i32, i32, i32
  }
  func.func @transform_4(%arg0: i32, %arg1: i32, %arg2: i32) -> (i32, i32, i32) {
    %c1_i32 = arith.constant 1 : i32
    %0 = arith.muli %arg1, %c1_i32 : i32
    %1 = arith.addi %0, %arg2 : i32
    %c0_i32 = arith.constant 0 : i32
    %c0_i32_0 = arith.constant 0 : i32
    return %1, %c0_i32, %arg0 : i32, i32, i32
  }
}

</mosaic_0001>

<llo_original>
// kernel: tpu_custom_call.1
$region0: #{tpu_custom_call.1}
  #allocation0 [shape = 'u32[]', space=smem, size = 0x4, offset = 0x4, fixed_abs, tag = 'smem constant byte address 0x4 - core index']
  #allocation1 [shape = 'u32[72,128]{1,0:T(1,128)}', space=vmem, size = 0x9000, scoped, tag = 'internal scratch']
  %s0 = inlined_call_operand.vmem [shape: bf16[8,9,9,4], index: 0, kind: input, shape index: {}]
  %s1 = inlined_call_operand.vmem [shape: bf16[16,4,128], index: 1, kind: input, shape index: {}]
  %s2 = inlined_call_operand.hbm [shape: bf16[2,64,128], index: 2, kind: output, shape index: {0}]
  %s3 = inlined_call_operand.hbm [shape: f32[2,1,128], index: 3, kind: output, shape index: {1}]
  %s4 = inlined_call_operand.hbm [shape: f32[2,1,128], index: 4, kind: output, shape index: {2}]
  %5 = xla_tuple %s2, %s3, %s4
  %s6 = sld [smem:[#allocation0]]
  $region57: #{tpu_custom_call.1} parent=0
    _
  %s8 = ssub.s32 1, %s6
  %s9 = scalar_select 0, %s8, %s6
  $region1: #{tpu_custom_call.1} parent=0
    #allocation2 [shape = 'u8[32768]{0}', space=vmem, size = 0x8000, scoped, tag = 'output window, operand 0']
    #allocation3 [shape = 's32[2]{0}', space=sflag, size = 0x8, scoped, tag = 'scoped memory for tpu_custom_call.1']
    #allocation4 [shape = 'u8[1024]{0}', space=vmem, size = 0x400, scoped, tag = 'output window, operand 1']
    #allocation5 [shape = 's32[2]{0}', space=sflag, size = 0x8, scoped, tag = 'scoped memory for tpu_custom_call.1']
    #allocation6 [shape = 'u8[1024]{0}', space=vmem, size = 0x400, scoped, tag = 'output window, operand 2']
    %10 = vsyncpa [#allocation3], 0
    %s11 = scalar_lea.sflag [#allocation3], 1
    %12 = vsyncpa %s11, 0
    %13 = vsyncpa [#allocation5], 0
    %s14 = scalar_lea.sflag [#allocation5], 1
    %15 = vsyncpa %s14, 0
    loop: start=0, step=1, limit=4
    $region2: #{tpu_custom_call.1} parent=1 // loop_pre_header
      _
    $region3: #{tpu_custom_call.1} parent=1 // loop_header
      %s17 = sphi 0, %s21
      %p18 = scmp.ge.s32.totalorder %s17, 4
      %s24 = sphi 0, %s43
      %s25 = sphi 0, %s39
      %s26 = sphi 0, %s35
      %s27 = sphi 0, %s24
      %s28 = sphi 0, %s25
      %s29 = sphi 0, %s26
      %s30 = sphi 0, %s27
      %s31 = sphi 0, %s28
      %s32 = sphi 0, %s29
      %s46 = sphi 0, %s48
      %s49 = sphi 0, %s46
      %s50 = sphi 0, %s49
      %s66 = sphi 0, %s50
      %s72 = sphi 0, %s74
      %s75 = sphi 0, %s72
      %s76 = sphi 0, %s75
      %s92 = sphi 0, %s76
      %s102 = sphi 0, %s104
      %s105 = sphi 0, %s102
      %s106 = sphi 0, %s105
      %s122 = sphi 0, %s106
      %s132 = sphi 0, %s134
      %s135 = sphi 0, %s132
      %s136 = sphi 0, %s135
      %s152 = sphi 0, %s136
      %s162 = sphi 0, %s164
      %s165 = sphi 0, %s162
      %s166 = sphi 0, %s165
      %s182 = sphi 0, %s166
    $region4: #{tpu_custom_call.1} parent=1 // loop_header_branch
      %20 = sbr.rel (%p18) target = $region8
    $region5: #{tpu_custom_call.1} parent=1 // loop_body
      %s22 = ssub.s32 %s17, 1
      %s23 = ssub.s32 %s17, 2
      %s33 = sadd.s32 1, %s26
      %p34 = scmp.ge.s32.totalorder %s33, 1
      %s35 = scalar_select %p34, 0, %s33
      %s36 = sadd.s32 1, %s25
      %s37 = scalar_select %p34, %s36, %s25
      %p38 = scmp.ge.s32.totalorder %s37, 2
      %s39 = scalar_select %p38, 0, %s37
      %s40 = sadd.s32 1, %s24
      %s41 = scalar_select %p38, %s40, %s24
      %p42 = scmp.ge.s32.totalorder %s41, 1
      %s43 = scalar_select %p42, 0, %s41
      %s44 = ssub.s32 %s25, %s39
      %p45 = scmp.eq.s32.totalorder %s44, 0
      %s47 = sadd.s32 %s46, 1
      %s48 = scalar_select %p45, %s46, %s47
      %p51 = pneg %p45
      %p52 = scmp.eq.s32.totalorder %s17, 1
      %p53 = por %p51, %p52
      %p54 = scmp.ne.s32.totalorder %s46, %s49
      %p55 = scmp.eq.s32.totalorder %s17, 0
      %p56 = por %p54, %p55
      %p57 = scmp.ne.s32.totalorder %s46, %s49
      %p58 = scmp.eq.s32.totalorder %s22, 1
      %p59 = por %p57, %p58
      %p60 = scmp.ne.s32.totalorder %s49, %s50
      %p61 = scmp.eq.s32.totalorder %s22, 0
      %p62 = por %p60, %p61
      %p63 = scmp.ne.s32.totalorder %s49, %s50
      %p64 = scmp.eq.s32.totalorder %s23, 1
      %p65 = por %p63, %p64
      %p67 = scmp.ne.s32.totalorder %s50, %s66
      %p68 = scmp.eq.s32.totalorder %s23, 0
      %p69 = por %p67, %p68
      %s70 = ssub.s32 %s24, %s43
      %p71 = scmp.eq.s32.totalorder %s70, 0
      %s73 = sadd.s32 %s72, 1
      %s74 = scalar_select %p71, %s72, %s73
      %p77 = pneg %p71
      %p78 = scmp.eq.s32.totalorder %s17, 1
      %p79 = por %p77, %p78
      %p80 = scmp.ne.s32.totalorder %s72, %s75
      %p81 = scmp.eq.s32.totalorder %s17, 0
      %p82 = por %p80, %p81
      %p83 = scmp.ne.s32.totalorder %s72, %s75
      %p84 = scmp.eq.s32.totalorder %s22, 1
      %p85 = por %p83, %p84
      %p86 = scmp.ne.s32.totalorder %s75, %s76
      %p87 = scmp.eq.s32.totalorder %s22, 0
      %p88 = por %p86, %p87
      %p89 = scmp.ne.s32.totalorder %s75, %s76
      %p90 = scmp.eq.s32.totalorder %s23, 1
      %p91 = por %p89, %p90
      %p93 = scmp.ne.s32.totalorder %s76, %s92
      %p94 = scmp.eq.s32.totalorder %s23, 0
      %p95 = por %p93, %p94
      %s96 = ssub.s32 %s25, %s39
      %s97 = ssub.s32 %s26, %s35
      %s98 = sor.u32 %s96, %s97
      %s99 = ssub.s32 %s24, %s43
      %s100 = sor.u32 %s98, %s99
      %p101 = scmp.eq.s32.totalorder %s100, 0
      %s103 = sadd.s32 %s102, 1
      %s104 = scalar_select %p101, %s102, %s103
      %p107 = pneg %p101
      %p108 = scmp.eq.s32.totalorder %s17, 1
      %p109 = por %p107, %p108
      %p110 = scmp.ne.s32.totalorder %s102, %s105
      %p111 = scmp.eq.s32.totalorder %s17, 0
      %p112 = por %p110, %p111
      %p113 = scmp.ne.s32.totalorder %s102, %s105
      %p114 = scmp.eq.s32.totalorder %s22, 1
      %p115 = por %p113, %p114
      %p116 = scmp.ne.s32.totalorder %s105, %s106
      %p117 = scmp.eq.s32.totalorder %s22, 0
      %p118 = por %p116, %p117
      %p119 = scmp.ne.s32.totalorder %s105, %s106
      %p120 = scmp.eq.s32.totalorder %s23, 1
      %p121 = por %p119, %p120
      %p123 = scmp.ne.s32.totalorder %s106, %s122
      %p124 = scmp.eq.s32.totalorder %s23, 0
      %p125 = por %p123, %p124
      %s126 = sadd.s32 %s25, %s26
      %s127 = sadd.s32 %s39, %s35
      %s128 = ssub.s32 %s126, %s127
      %s129 = ssub.s32 %s24, %s43
      %s130 = sor.u32 %s128, %s129
      %p131 = scmp.eq.s32.totalorder %s130, 0
      %s133 = sadd.s32 %s132, 1
      %s134 = scalar_select %p131, %s132, %s133
      %p137 = pneg %p131
      %p138 = scmp.eq.s32.totalorder %s17, 1
      %p139 = por %p137, %p138
      %p140 = scmp.ne.s32.totalorder %s132, %s135
      %p141 = scmp.eq.s32.totalorder %s17, 0
      %p142 = por %p140, %p141
      %p143 = scmp.ne.s32.totalorder %s132, %s135
      %p144 = scmp.eq.s32.totalorder %s22, 1
      %p145 = por %p143, %p144
      %p146 = scmp.ne.s32.totalorder %s135, %s136
      %p147 = scmp.eq.s32.totalorder %s22, 0
      %p148 = por %p146, %p147
      %p149 = scmp.ne.s32.totalorder %s135, %s136
      %p150 = scmp.eq.s32.totalorder %s23, 1
      %p151 = por %p149, %p150
      %p153 = scmp.ne.s32.totalorder %s136, %s152
      %p154 = scmp.eq.s32.totalorder %s23, 0
      %p155 = por %p153, %p154
      %s156 = sadd.s32 %s25, %s26
      %s157 = sadd.s32 %s39, %s35
      %s158 = ssub.s32 %s156, %s157
      %s159 = ssub.s32 %s24, %s43
      %s160 = sor.u32 %s158, %s159
      %p161 = scmp.eq.s32.totalorder %s160, 0
      %s163 = sadd.s32 %s162, 1
      %s164 = scalar_select %p161, %s162, %s163
      %p167 = pneg %p161
      %p168 = scmp.eq.s32.totalorder %s17, 1
      %p169 = por %p167, %p168
      %p170 = scmp.ne.s32.totalorder %s162, %s165
      %p171 = scmp.eq.s32.totalorder %s17, 0
      %p172 = por %p170, %p171
      %p173 = scmp.ne.s32.totalorder %s162, %s165
      %p174 = scmp.eq.s32.totalorder %s22, 1
      %p175 = por %p173, %p174
      %p176 = scmp.ne.s32.totalorder %s165, %s166
      %p177 = scmp.eq.s32.totalorder %s22, 0
      %p178 = por %p176, %p177
      %p179 = scmp.ne.s32.totalorder %s165, %s166
      %p180 = scmp.eq.s32.totalorder %s23, 1
      %p181 = por %p179, %p180
      %p183 = scmp.ne.s32.totalorder %s166, %s182
      %p184 = scmp.eq.s32.totalorder %s23, 0
      %p185 = por %p183, %p184
      %p186 = scmp.le.s32.totalorder 1, %s17
      %p187 = scmp.lt.s32.totalorder %s17, 3
      %p188 = pnand %p186, %p187
      %p189 = pneg %p188
      // Predicated region
      $region9: #{tpu_custom_call.1} parent=5 // pred_check
        _
      $region10: #{tpu_custom_call.1} parent=5 // pred_check_branch
        %191 = sbr.rel (%p188) target = $region12
      $region11: #{tpu_custom_call.1} parent=5 // pred_region
        %s192 = ssub.s32 %s17, 1
        // Predicated region
        $region13: #{tpu_custom_call.1} parent=11 // pred_check
          %p193 = pneg %p88
        $region14: #{tpu_custom_call.1} parent=11 // pred_check_branch
          %195 = sbr.rel (%p193) target = $region16
        $region15: #{tpu_custom_call.1} parent=11 // pred_region
          %p196 = scmp.lt.s32.totalorder %s27, 0
          %s197 = scalar_select %p196, %s27, 0
          %s198 = smul.addr %s197, 2
          %s199 = scalar_lea.vmem %s1, %s198
        $region16: #{tpu_custom_call.1} parent=11 // pred_fallthru
          _
      $region12: #{tpu_custom_call.1} parent=5 // pred_fallthru
        _
      %p200 = scmp.lt.s32.totalorder %s17, 2
      // Predicated region
      $region17: #{tpu_custom_call.1} parent=5 // pred_check
        %p201 = pneg %p200
      $region18: #{tpu_custom_call.1} parent=5 // pred_check_branch
        %203 = sbr.rel (%p201) target = $region20
      $region19: #{tpu_custom_call.1} parent=5 // pred_region
        // Predicated region
        $region21: #{tpu_custom_call.1} parent=19 // pred_check
          %p204 = pneg %p56
        $region22: #{tpu_custom_call.1} parent=19 // pred_check_branch
          %206 = sbr.rel (%p204) target = $region24
        $region23: #{tpu_custom_call.1} parent=19 // pred_region
          %s207 = smul.u32 4, %s25
          %p208 = scmp.lt.s32.totalorder %s207, 7
          %s209 = scalar_select %p208, %s207, 7
          %s210 = smul.addr %s209, 18
          %s211 = smul.addr %s210, 4
          %s212 = scalar_lea.vmem %s0, %s211
          %s213 = smul.u32 4, %s25
        $region24: #{tpu_custom_call.1} parent=19 // pred_fallthru
          _
      $region20: #{tpu_custom_call.1} parent=5 // pred_fallthru
        _
      %p214 = scmp.le.s32.totalorder 1, %s17
      %p215 = scmp.lt.s32.totalorder %s17, 3
      %p216 = pnand %p214, %p215
      %p217 = pneg %p216
      // Predicated region
      $region25: #{tpu_custom_call.1} parent=5 // pred_check
        _
      $region26: #{tpu_custom_call.1} parent=5 // pred_check_branch
        %219 = sbr.rel (%p216) target = $region28
      $region27: #{tpu_custom_call.1} parent=5 // pred_region
        %s220 = ssub.s32 %s17, 1
        %s221 = smul.u32 4, %s28
        %p222 = scmp.lt.s32.totalorder %s221, 7
        %s223 = scalar_select %p222, %s221, 7
        %s224 = smul.addr %s223, 18
        %s225 = smul.addr %s224, 4
        %s226 = scalar_lea.vmem %s0, %s225
        %p227 = pneg %p62
        %p228 = pneg %p59
        %p229 = scmp.lt.s32.totalorder %s27, 0
        %s230 = scalar_select %p229, %s27, 0
        %s231 = smul.addr %s230, 2
        %s232 = scalar_lea.vmem %s1, %s231
        %p233 = pneg %p88
        %p234 = pneg %p85
        %p235 = pneg %p118
        %p236 = pneg %p115
        %s237 = sand.u32 %s105, 1
        %s238 = scalar_lea.sflag [#allocation3], %s237
        %s239 = sand.u32 %s105, 1
        %s240 = smul.addr %s239, 32
        %s241 = scalar_lea.vmem [#allocation2], %s240
        %p242 = pneg %p148
        %p243 = pneg %p145
        %s244 = sand.u32 %s22, 1
        %s245 = scalar_lea.sflag [#allocation5], %s244
        %s246 = sand.u32 %s135, 1
        %s247 = scalar_lea.vmem [#allocation4], %s246
        %p248 = pneg %p178
        %p249 = pneg %p175
        %s250 = sand.u32 %s22, 1
        %s251 = scalar_lea.sflag [#allocation5], %s250
        %s252 = sand.u32 %s165, 1
        %s253 = scalar_lea.vmem [#allocation6], %s252
        %s254 = smul.u32 4, %s28
        %p255 = scmp.lt.s32.totalorder %s254, 7
        %s256 = scalar_select %p255, %s254, 7
        %s257 = smul.addr %s256, 18
        %s258 = smul.addr %s257, 4
        %s259 = scalar_lea.vmem %s0, %s258
        %s260 = smul.u32 4, %s28
        %p261 = scmp.lt.s32.totalorder %s27, 0
        %s262 = scalar_select %p261, %s27, 0
        %s263 = smul.addr %s262, 2
        %s264 = scalar_lea.vmem %s1, %s263
        %s265 = smul.u32 8, %s29
        %s266 = sadd.s32 %s28, %s29
        %s267 = sadd.s32 %s28, %s29
        %v269 = vld [vmem:[%s259] sm:$0xf]
        %v270 = vld [vmem:[%s259 + $0x8] sm:$0xf]
        %v271 = vld [vmem:[%s259 + $0x10] sm:$0xf]
        %v272 = vld [vmem:[%s259 + $0x18] sm:$0xf]
        %v273 = vld [vmem:[%s259 + $0x20] sm:$0xf]
        %v274 = vld [vmem:[%s259 + $0x28] sm:$0xf]
        %v275 = vld [vmem:[%s259 + $0x30] sm:$0xf]
        %v276 = vld [vmem:[%s259 + $0x38] sm:$0xf]
        %v277 = vld [vmem:[%s264] sm:$0x3]
        %s278 = scalar_lea.vmem %s259, 72
        %v279 = vld [vmem:[%s278] sm:$0xf]
        %v280 = vld [vmem:[%s278 + $0x8] sm:$0xf]
        %v281 = vld [vmem:[%s278 + $0x10] sm:$0xf]
        %v282 = vld [vmem:[%s278 + $0x18] sm:$0xf]
        %v283 = vld [vmem:[%s278 + $0x20] sm:$0xf]
        %v284 = vld [vmem:[%s278 + $0x28] sm:$0xf]
        %v285 = vld [vmem:[%s278 + $0x30] sm:$0xf]
        %v286 = vld [vmem:[%s278 + $0x38] sm:$0xf]
        %s287 = scalar_lea.vmem %s264, 2
        %v288 = vld [vmem:[%s287] sm:$0x3]
        %v297 = vunpack.c.l.b16 %v279
        %v298 = vunpack.c.l.b16 %v280
        %v299 = vunpack.c.l.b16 %v281
        %v300 = vunpack.c.l.b16 %v282
        %v301 = vunpack.c.l.b16 %v283
        %v302 = vunpack.c.l.b16 %v284
        %v303 = vunpack.c.l.b16 %v285
        %v304 = vunpack.c.l.b16 %v286
        %v305 = vpack.c.b16 %v298, %v297
        %v306 = vpack.c.b16 %v300, %v299
        %v307 = vpack.c.b16 %v302, %v301
        %v308 = vpack.c.b16 %v304, %v303
        %vm309 = vcmask 31744
        %v311 = vsel %vm309, %v305, 0
        %v314 = vsel %vm309, %v306, 0
        %v317 = vsel %vm309, %v307, 0
        %v320 = vsel %vm309, %v308, 0
        %vm322 = vcmask 1041408
        %v324 = vsel %vm322, %v288, 0
        %326 = vmatpush.bf16.msra.mxu0 0
        %327 = vmatpush.bf16.msra.mxu0 0
        %328 = vmatpush.bf16.msra.mxu0 0
        %329 = vmatpush.bf16.msra.mxu0 0
        %330 = vmatpush.bf16.msra.mxu0 0
        %331 = vmatpush.bf16.msra.mxu0 0
        %332 = vmatpush.bf16.msra.mxu0 0
        %333 = vmatpush.bf16.msra.mxu0 %v324
        %334 = vmatmul.bf16.gmra.mxu0 %v311
        %v335 = vpop.f32.mrf.mxu0
        %v336 = vadd.f32 0.0, %v335
        %v337 = vpop.f32.mrf.mxu0
        %v338 = vadd.f32 0.0, %v337
        %339 = vmatmul.bf16.gmra.mxu0 %v314
        %v340 = vpop.f32.mrf.mxu0
        %v341 = vadd.f32 0.0, %v340
        %v342 = vpop.f32.mrf.mxu0
        %v343 = vadd.f32 0.0, %v342
        %344 = vmatmul.bf16.gmra.mxu0 %v317
        %v345 = vpop.f32.mrf.mxu0
        %v346 = vadd.f32 0.0, %v345
        %v347 = vpop.f32.mrf.mxu0
        %v348 = vadd.f32 0.0, %v347
        %349 = vmatmul.bf16.gmra.mxu0 %v320
        %v350 = vpop.f32.mrf.mxu0
        %v351 = vadd.f32 0.0, %v350
        %v352 = vpop.f32.mrf.mxu0
        %v353 = vadd.f32 0.0, %v352
        %354 = vdwg.mxu0
        %v363 = vunpack.c.l.b16 %v269
        %v364 = vunpack.c.l.b16 %v270
        %v365 = vunpack.c.l.b16 %v271
        %v366 = vunpack.c.l.b16 %v272
        %v367 = vunpack.c.l.b16 %v273
        %v368 = vunpack.c.l.b16 %v274
        %v369 = vunpack.c.l.b16 %v275
        %v370 = vunpack.c.l.b16 %v276
        %v371 = vpack.c.b16 %v364, %v363
        %v372 = vpack.c.b16 %v366, %v365
        %v373 = vpack.c.b16 %v368, %v367
        %v374 = vpack.c.b16 %v370, %v369
        %v376 = vsel %vm309, %v371, 0
        %v379 = vsel %vm309, %v372, 0
        %v382 = vsel %vm309, %v373, 0
        %v385 = vsel %vm309, %v374, 0
        %v388 = vsel %vm322, %v277, 0
        %390 = vmatpush.bf16.msra.mxu0 0
        %391 = vmatpush.bf16.msra.mxu0 0
        %392 = vmatpush.bf16.msra.mxu0 0
        %393 = vmatpush.bf16.msra.mxu0 0
        %394 = vmatpush.bf16.msra.mxu0 0
        %395 = vmatpush.bf16.msra.mxu0 0
        %396 = vmatpush.bf16.msra.mxu0 0
        %397 = vmatpush.bf16.msra.mxu0 %v388
        %398 = vmatmul.bf16.gmra.mxu0 %v376
        %v399 = vpop.f32.mrf.mxu0
        %v400 = vadd.f32 %v336, %v399
        %v401 = vpop.f32.mrf.mxu0
        %v402 = vadd.f32 %v338, %v401
        %403 = vmatmul.bf16.gmra.mxu0 %v379
        %v404 = vpop.f32.mrf.mxu0
        %v405 = vadd.f32 %v341, %v404
        %v406 = vpop.f32.mrf.mxu0
        %v407 = vadd.f32 %v343, %v406
        %408 = vmatmul.bf16.gmra.mxu0 %v382
        %v409 = vpop.f32.mrf.mxu0
        %v410 = vadd.f32 %v346, %v409
        %v411 = vpop.f32.mrf.mxu0
        %v412 = vadd.f32 %v348, %v411
        %413 = vmatmul.bf16.gmra.mxu0 %v385
        %v414 = vpop.f32.mrf.mxu0
        %v415 = vadd.f32 %v351, %v414
        %v416 = vpop.f32.mrf.mxu0
        %v417 = vadd.f32 %v353, %v416
        %418 = vdwg.mxu0
        %v419 = vld [vmem:[%s259] sm:$0xf]
        %v420 = vld [vmem:[%s259 + $0x4] sm:$0x1]
        %v421 = vld [vmem:[%s259 + $0x8] sm:$0xf]
        %v422 = vld [vmem:[%s259 + $0xc] sm:$0x1]
        %v423 = vld [vmem:[%s259 + $0x10] sm:$0xf]
        %v424 = vld [vmem:[%s259 + $0x14] sm:$0x1]
        %v425 = vld [vmem:[%s259 + $0x18] sm:$0xf]
        %v426 = vld [vmem:[%s259 + $0x1c] sm:$0x1]
        %v427 = vld [vmem:[%s259 + $0x20] sm:$0xf]
        %v428 = vld [vmem:[%s259 + $0x24] sm:$0x1]
        %v429 = vld [vmem:[%s259 + $0x28] sm:$0xf]
        %v430 = vld [vmem:[%s259 + $0x2c] sm:$0x1]
        %v431 = vld [vmem:[%s259 + $0x30] sm:$0xf]
        %v432 = vld [vmem:[%s259 + $0x34] sm:$0x1]
        %v433 = vld [vmem:[%s259 + $0x38] sm:$0xf]
        %v434 = vld [vmem:[%s259 + $0x3c] sm:$0x1]
        %vm435 = vsmask.f32 3328
        %vm436 = vsmask.f32 7440
        %vm437 = vmor %vm435, %vm436
        %v439 = vshrl.u32 %v419, 16
        %v441 = vrot.slane %v439, 4
        %v442 = vshll.u32 %v419, 16
        %v444 = vrot.slane %v442, 5
        %v445 = vor.u32 %v441, %v444
        %v446 = vrot.slane %v445, 4
        %v448 = vshll.u32 %v420, 16
        %v450 = vrot.slane %v448, 5
        %v451 = vsel %vm437, %v446, %v450
        %v453 = vshrl.u32 %v421, 16
        %v455 = vrot.slane %v453, 4
        %v456 = vshll.u32 %v421, 16
        %v458 = vrot.slane %v456, 5
        %v459 = vor.u32 %v455, %v458
        %v460 = vrot.slane %v459, 4
        %v462 = vshll.u32 %v422, 16
        %v464 = vrot.slane %v462, 5
        %v465 = vsel %vm437, %v460, %v464
        %v467 = vshrl.u32 %v423, 16
        %v469 = vrot.slane %v467, 4
        %v470 = vshll.u32 %v423, 16
        %v472 = vrot.slane %v470, 5
        %v473 = vor.u32 %v469, %v472
        %v474 = vrot.slane %v473, 4
        %v476 = vshll.u32 %v424, 16
        %v478 = vrot.slane %v476, 5
        %v479 = vsel %vm437, %v474, %v478
        %v481 = vshrl.u32 %v425, 16
        %v483 = vrot.slane %v481, 4
        %v484 = vshll.u32 %v425, 16
        %v486 = vrot.slane %v484, 5
        %v487 = vor.u32 %v483, %v486
        %v488 = vrot.slane %v487, 4
        %v490 = vshll.u32 %v426, 16
        %v492 = vrot.slane %v490, 5
        %v493 = vsel %vm437, %v488, %v492
        %v495 = vshrl.u32 %v427, 16
        %v497 = vrot.slane %v495, 4
        %v498 = vshll.u32 %v427, 16
        %v500 = vrot.slane %v498, 5
        %v501 = vor.u32 %v497, %v500
        %v502 = vrot.slane %v501, 4
        %v504 = vshll.u32 %v428, 16
        %v506 = vrot.slane %v504, 5
        %v507 = vsel %vm437, %v502, %v506
        %v509 = vshrl.u32 %v429, 16
        %v511 = vrot.slane %v509, 4
        %v512 = vshll.u32 %v429, 16
        %v514 = vrot.slane %v512, 5
        %v515 = vor.u32 %v511, %v514
        %v516 = vrot.slane %v515, 4
        %v518 = vshll.u32 %v430, 16
        %v520 = vrot.slane %v518, 5
        %v521 = vsel %vm437, %v516, %v520
        %v523 = vshrl.u32 %v431, 16
        %v525 = vrot.slane %v523, 4
        %v526 = vshll.u32 %v431, 16
        %v528 = vrot.slane %v526, 5
        %v529 = vor.u32 %v525, %v528
        %v530 = vrot.slane %v529, 4
        %v532 = vshll.u32 %v432, 16
        %v534 = vrot.slane %v532, 5
        %v535 = vsel %vm437, %v530, %v534
        %v537 = vshrl.u32 %v433, 16
        %v539 = vrot.slane %v537, 4
        %v540 = vshll.u32 %v433, 16
        %v542 = vrot.slane %v540, 5
        %v543 = vor.u32 %v539, %v542
        %v544 = vrot.slane %v543, 4
        %v546 = vshll.u32 %v434, 16
        %v548 = vrot.slane %v546, 5
        %v549 = vsel %vm437, %v544, %v548
        %s550 = scalar_lea.vmem %s264, 4
        %v551 = vld [vmem:[%s550] sm:$0x3]
        %v552 = vunpack.c.l.b16 %v451
        %v553 = vunpack.c.l.b16 %v465
        %v554 = vunpack.c.l.b16 %v479
        %v555 = vunpack.c.l.b16 %v493
        %v556 = vunpack.c.l.b16 %v507
        %v557 = vunpack.c.l.b16 %v521
        %v558 = vunpack.c.l.b16 %v535
        %v559 = vunpack.c.l.b16 %v549
        %v560 = vpack.c.b16 %v553, %v552
        %v561 = vpack.c.b16 %v555, %v554
        %v562 = vpack.c.b16 %v557, %v556
        %v563 = vpack.c.b16 %v559, %v558
        %v565 = vsel %vm309, %v560, 0
        %v568 = vsel %vm309, %v561, 0
        %v571 = vsel %vm309, %v562, 0
        %v574 = vsel %vm309, %v563, 0
        %v577 = vsel %vm322, %v551, 0
        %579 = vmatpush.bf16.msra.mxu0 0
        %580 = vmatpush.bf16.msra.mxu0 0
        %581 = vmatpush.bf16.msra.mxu0 0
        %582 = vmatpush.bf16.msra.mxu0 0
        %583 = vmatpush.bf16.msra.mxu0 0
        %584 = vmatpush.bf16.msra.mxu0 0
        %585 = vmatpush.bf16.msra.mxu0 0
        %586 = vmatpush.bf16.msra.mxu0 %v577
        %587 = vmatmul.bf16.gmra.mxu0 %v565
        %v588 = vpop.f32.mrf.mxu0
        %v589 = vadd.f32 0.0, %v588
        %v590 = vpop.f32.mrf.mxu0
        %v591 = vadd.f32 0.0, %v590
        %592 = vmatmul.bf16.gmra.mxu0 %v568
        %v593 = vpop.f32.mrf.mxu0
        %v594 = vadd.f32 0.0, %v593
        %v595 = vpop.f32.mrf.mxu0
        %v596 = vadd.f32 0.0, %v595
        %597 = vmatmul.bf16.gmra.mxu0 %v571
        %v598 = vpop.f32.mrf.mxu0
        %v599 = vadd.f32 0.0, %v598
        %v600 = vpop.f32.mrf.mxu0
        %v601 = vadd.f32 0.0, %v600
        %602 = vmatmul.bf16.gmra.mxu0 %v574
        %v603 = vpop.f32.mrf.mxu0
        %v604 = vadd.f32 0.0, %v603
        %v605 = vpop.f32.mrf.mxu0
        %v606 = vadd.f32 0.0, %v605
        %607 = vdwg.mxu0
        %v608 = vadd.f32 %v400, %v589
        %v609 = vadd.f32 %v402, %v591
        %v610 = vadd.f32 %v405, %v594
        %v611 = vadd.f32 %v407, %v596
        %v612 = vadd.f32 %v410, %v599
        %v613 = vadd.f32 %v412, %v601
        %v614 = vadd.f32 %v415, %v604
        %v615 = vadd.f32 %v417, %v606
        %v616 = vld [vmem:[%s278] sm:$0xf]
        %v617 = vld [vmem:[%s278 + $0x4] sm:$0x1]
        %v618 = vld [vmem:[%s278 + $0x8] sm:$0xf]
        %v619 = vld [vmem:[%s278 + $0xc] sm:$0x1]
        %v620 = vld [vmem:[%s278 + $0x10] sm:$0xf]
        %v621 = vld [vmem:[%s278 + $0x14] sm:$0x1]
        %v622 = vld [vmem:[%s278 + $0x18] sm:$0xf]
        %v623 = vld [vmem:[%s278 + $0x1c] sm:$0x1]
        %v624 = vld [vmem:[%s278 + $0x20] sm:$0xf]
        %v625 = vld [vmem:[%s278 + $0x24] sm:$0x1]
        %v626 = vld [vmem:[%s278 + $0x28] sm:$0xf]
        %v627 = vld [vmem:[%s278 + $0x2c] sm:$0x1]
        %v628 = vld [vmem:[%s278 + $0x30] sm:$0xf]
        %v629 = vld [vmem:[%s278 + $0x34] sm:$0x1]
        %v630 = vld [vmem:[%s278 + $0x38] sm:$0xf]
        %v631 = vld [vmem:[%s278 + $0x3c] sm:$0x1]
        %v633 = vshrl.u32 %v616, 16
        %v635 = vrot.slane %v633, 4
        %v636 = vshll.u32 %v616, 16
        %v638 = vrot.slane %v636, 5
        %v639 = vor.u32 %v635, %v638
        %v640 = vrot.slane %v639, 4
        %v642 = vshll.u32 %v617, 16
        %v644 = vrot.slane %v642, 5
        %v645 = vsel %vm437, %v640, %v644
        %v647 = vshrl.u32 %v618, 16
        %v649 = vrot.slane %v647, 4
        %v650 = vshll.u32 %v618, 16
        %v652 = vrot.slane %v650, 5
        %v653 = vor.u32 %v649, %v652
        %v654 = vrot.slane %v653, 4
        %v656 = vshll.u32 %v619, 16
        %v658 = vrot.slane %v656, 5
        %v659 = vsel %vm437, %v654, %v658
        %v661 = vshrl.u32 %v620, 16
        %v663 = vrot.slane %v661, 4
        %v664 = vshll.u32 %v620, 16
        %v666 = vrot.slane %v664, 5
        %v667 = vor.u32 %v663, %v666
        %v668 = vrot.slane %v667, 4
        %v670 = vshll.u32 %v621, 16
        %v672 = vrot.slane %v670, 5
        %v673 = vsel %vm437, %v668, %v672
        %v675 = vshrl.u32 %v622, 16
        %v677 = vrot.slane %v675, 4
        %v678 = vshll.u32 %v622, 16
        %v680 = vrot.slane %v678, 5
        %v681 = vor.u32 %v677, %v680
        %v682 = vrot.slane %v681, 4
        %v684 = vshll.u32 %v623, 16
        %v686 = vrot.slane %v684, 5
        %v687 = vsel %vm437, %v682, %v686
        %v689 = vshrl.u32 %v624, 16
        %v691 = vrot.slane %v689, 4
        %v692 = vshll.u32 %v624, 16
        %v694 = vrot.slane %v692, 5
        %v695 = vor.u32 %v691, %v694
        %v696 = vrot.slane %v695, 4
        %v698 = vshll.u32 %v625, 16
        %v700 = vrot.slane %v698, 5
        %v701 = vsel %vm437, %v696, %v700
        %v703 = vshrl.u32 %v626, 16
        %v705 = vrot.slane %v703, 4
        %v706 = vshll.u32 %v626, 16
        %v708 = vrot.slane %v706, 5
        %v709 = vor.u32 %v705, %v708
        %v710 = vrot.slane %v709, 4
        %v712 = vshll.u32 %v627, 16
        %v714 = vrot.slane %v712, 5
        %v715 = vsel %vm437, %v710, %v714
        %v717 = vshrl.u32 %v628, 16
        %v719 = vrot.slane %v717, 4
        %v720 = vshll.u32 %v628, 16
        %v722 = vrot.slane %v720, 5
        %v723 = vor.u32 %v719, %v722
        %v724 = vrot.slane %v723, 4
        %v726 = vshll.u32 %v629, 16
        %v728 = vrot.slane %v726, 5
        %v729 = vsel %vm437, %v724, %v728
        %v731 = vshrl.u32 %v630, 16
        %v733 = vrot.slane %v731, 4
        %v734 = vshll.u32 %v630, 16
        %v736 = vrot.slane %v734, 5
        %v737 = vor.u32 %v733, %v736
        %v738 = vrot.slane %v737, 4
        %v740 = vshll.u32 %v631, 16
        %v742 = vrot.slane %v740, 5
        %v743 = vsel %vm437, %v738, %v742
        %s744 = scalar_lea.vmem %s264, 6
        %v745 = vld [vmem:[%s744] sm:$0x3]
        %v746 = vunpack.c.l.b16 %v645
        %v747 = vunpack.c.l.b16 %v659
        %v748 = vunpack.c.l.b16 %v673
        %v749 = vunpack.c.l.b16 %v687
        %v750 = vunpack.c.l.b16 %v701
        %v751 = vunpack.c.l.b16 %v715
        %v752 = vunpack.c.l.b16 %v729
        %v753 = vunpack.c.l.b16 %v743
        %v754 = vpack.c.b16 %v747, %v746
        %v755 = vpack.c.b16 %v749, %v748
        %v756 = vpack.c.b16 %v751, %v750
        %v757 = vpack.c.b16 %v753, %v752
        %v759 = vsel %vm309, %v754, 0
        %v762 = vsel %vm309, %v755, 0
        %v765 = vsel %vm309, %v756, 0
        %v768 = vsel %vm309, %v757, 0
        %v771 = vsel %vm322, %v745, 0
        %773 = vmatpush.bf16.msra.mxu0 0
        %774 = vmatpush.bf16.msra.mxu0 0
        %775 = vmatpush.bf16.msra.mxu0 0
        %776 = vmatpush.bf16.msra.mxu0 0
        %777 = vmatpush.bf16.msra.mxu0 0
        %778 = vmatpush.bf16.msra.mxu0 0
        %779 = vmatpush.bf16.msra.mxu0 0
        %780 = vmatpush.bf16.msra.mxu0 %v771
        %781 = vmatmul.bf16.gmra.mxu0 %v759
        %v782 = vpop.f32.mrf.mxu0
        %v783 = vadd.f32 0.0, %v782
        %v784 = vpop.f32.mrf.mxu0
        %v785 = vadd.f32 0.0, %v784
        %786 = vmatmul.bf16.gmra.mxu0 %v762
        %v787 = vpop.f32.mrf.mxu0
        %v788 = vadd.f32 0.0, %v787
        %v789 = vpop.f32.mrf.mxu0
        %v790 = vadd.f32 0.0, %v789
        %791 = vmatmul.bf16.gmra.mxu0 %v765
        %v792 = vpop.f32.mrf.mxu0
        %v793 = vadd.f32 0.0, %v792
        %v794 = vpop.f32.mrf.mxu0
        %v795 = vadd.f32 0.0, %v794
        %796 = vmatmul.bf16.gmra.mxu0 %v768
        %v797 = vpop.f32.mrf.mxu0
        %v798 = vadd.f32 0.0, %v797
        %v799 = vpop.f32.mrf.mxu0
        %v800 = vadd.f32 0.0, %v799
        %801 = vdwg.mxu0
        %v802 = vadd.f32 %v608, %v783
        %v803 = vadd.f32 %v609, %v785
        %v804 = vadd.f32 %v610, %v788
        %v805 = vadd.f32 %v611, %v790
        %v806 = vadd.f32 %v612, %v793
        %v807 = vadd.f32 %v613, %v795
        %v808 = vadd.f32 %v614, %v798
        %v809 = vadd.f32 %v615, %v800
        %s810 = scalar_lea.vmem %s259, 144
        %v811 = vld [vmem:[%s810] sm:$0xf]
        %v812 = vld [vmem:[%s810 + $0x8] sm:$0xf]
        %v813 = vld [vmem:[%s810 + $0x10] sm:$0xf]
        %v814 = vld [vmem:[%s810 + $0x18] sm:$0xf]
        %v815 = vld [vmem:[%s810 + $0x20] sm:$0xf]
        %v816 = vld [vmem:[%s810 + $0x28] sm:$0xf]
        %v817 = vld [vmem:[%s810 + $0x30] sm:$0xf]
        %v818 = vld [vmem:[%s810 + $0x38] sm:$0xf]
        %s819 = scalar_lea.vmem %s264, 8
        %v820 = vld [vmem:[%s819] sm:$0x3]
        %v829 = vunpack.c.l.b16 %v811
        %v830 = vunpack.c.l.b16 %v812
        %v831 = vunpack.c.l.b16 %v813
        %v832 = vunpack.c.l.b16 %v814
        %v833 = vunpack.c.l.b16 %v815
        %v834 = vunpack.c.l.b16 %v816
        %v835 = vunpack.c.l.b16 %v817
        %v836 = vunpack.c.l.b16 %v818
        %v837 = vpack.c.b16 %v830, %v829
        %v838 = vpack.c.b16 %v832, %v831
        %v839 = vpack.c.b16 %v834, %v833
        %v840 = vpack.c.b16 %v836, %v835
        %v842 = vsel %vm309, %v837, 0
        %v845 = vsel %vm309, %v838, 0
        %v848 = vsel %vm309, %v839, 0
        %v851 = vsel %vm309, %v840, 0
        %v854 = vsel %vm322, %v820, 0
        %856 = vmatpush.bf16.msra.mxu0 0
        %857 = vmatpush.bf16.msra.mxu0 0
        %858 = vmatpush.bf16.msra.mxu0 0
        %859 = vmatpush.bf16.msra.mxu0 0
        %860 = vmatpush.bf16.msra.mxu0 0
        %861 = vmatpush.bf16.msra.mxu0 0
        %862 = vmatpush.bf16.msra.mxu0 0
        %863 = vmatpush.bf16.msra.mxu0 %v854
        %864 = vmatmul.bf16.gmra.mxu0 %v842
        %v865 = vpop.f32.mrf.mxu0
        %v866 = vadd.f32 0.0, %v865
        %v867 = vpop.f32.mrf.mxu0
        %v868 = vadd.f32 0.0, %v867
        %869 = vmatmul.bf16.gmra.mxu0 %v845
        %v870 = vpop.f32.mrf.mxu0
        %v871 = vadd.f32 0.0, %v870
        %v872 = vpop.f32.mrf.mxu0
        %v873 = vadd.f32 0.0, %v872
        %874 = vmatmul.bf16.gmra.mxu0 %v848
        %v875 = vpop.f32.mrf.mxu0
        %v876 = vadd.f32 0.0, %v875
        %v877 = vpop.f32.mrf.mxu0
        %v878 = vadd.f32 0.0, %v877
        %879 = vmatmul.bf16.gmra.mxu0 %v851
        %v880 = vpop.f32.mrf.mxu0
        %v881 = vadd.f32 0.0, %v880
        %v882 = vpop.f32.mrf.mxu0
        %v883 = vadd.f32 0.0, %v882
        %884 = vdwg.mxu0
        %v885 = vadd.f32 %v802, %v866
        %v886 = vadd.f32 %v803, %v868
        %v887 = vadd.f32 %v804, %v871
        %v888 = vadd.f32 %v805, %v873
        %v889 = vadd.f32 %v806, %v876
        %v890 = vadd.f32 %v807, %v878
        %v891 = vadd.f32 %v808, %v881
        %v892 = vadd.f32 %v809, %v883
        %s893 = scalar_lea.vmem %s259, 216
        %v894 = vld [vmem:[%s893] sm:$0xf]
        %v895 = vld [vmem:[%s893 + $0x8] sm:$0xf]
        %v896 = vld [vmem:[%s893 + $0x10] sm:$0xf]
        %v897 = vld [vmem:[%s893 + $0x18] sm:$0xf]
        %v898 = vld [vmem:[%s893 + $0x20] sm:$0xf]
        %v899 = vld [vmem:[%s893 + $0x28] sm:$0xf]
        %v900 = vld [vmem:[%s893 + $0x30] sm:$0xf]
        %v901 = vld [vmem:[%s893 + $0x38] sm:$0xf]
        %s902 = scalar_lea.vmem %s264, 10
        %v903 = vld [vmem:[%s902] sm:$0x3]
        %v912 = vunpack.c.l.b16 %v894
        %v913 = vunpack.c.l.b16 %v895
        %v914 = vunpack.c.l.b16 %v896
        %v915 = vunpack.c.l.b16 %v897
        %v916 = vunpack.c.l.b16 %v898
        %v917 = vunpack.c.l.b16 %v899
        %v918 = vunpack.c.l.b16 %v900
        %v919 = vunpack.c.l.b16 %v901
        %v920 = vpack.c.b16 %v913, %v912
        %v921 = vpack.c.b16 %v915, %v914
        %v922 = vpack.c.b16 %v917, %v916
        %v923 = vpack.c.b16 %v919, %v918
        %v925 = vsel %vm309, %v920, 0
        %v928 = vsel %vm309, %v921, 0
        %v931 = vsel %vm309, %v922, 0
        %v934 = vsel %vm309, %v923, 0
        %v937 = vsel %vm322, %v903, 0
        %939 = vmatpush.bf16.msra.mxu0 0
        %940 = vmatpush.bf16.msra.mxu0 0
        %941 = vmatpush.bf16.msra.mxu0 0
        %942 = vmatpush.bf16.msra.mxu0 0
        %943 = vmatpush.bf16.msra.mxu0 0
        %944 = vmatpush.bf16.msra.mxu0 0
        %945 = vmatpush.bf16.msra.mxu0 0
        %946 = vmatpush.bf16.msra.mxu0 %v937
        %947 = vmatmul.bf16.gmra.mxu0 %v925
        %v948 = vpop.f32.mrf.mxu0
        %v949 = vadd.f32 0.0, %v948
        %v950 = vpop.f32.mrf.mxu0
        %v951 = vadd.f32 0.0, %v950
        %952 = vmatmul.bf16.gmra.mxu0 %v928
        %v953 = vpop.f32.mrf.mxu0
        %v954 = vadd.f32 0.0, %v953
        %v955 = vpop.f32.mrf.mxu0
        %v956 = vadd.f32 0.0, %v955
        %957 = vmatmul.bf16.gmra.mxu0 %v931
        %v958 = vpop.f32.mrf.mxu0
        %v959 = vadd.f32 0.0, %v958
        %v960 = vpop.f32.mrf.mxu0
        %v961 = vadd.f32 0.0, %v960
        %962 = vmatmul.bf16.gmra.mxu0 %v934
        %v963 = vpop.f32.mrf.mxu0
        %v964 = vadd.f32 0.0, %v963
        %v965 = vpop.f32.mrf.mxu0
        %v966 = vadd.f32 0.0, %v965
        %967 = vdwg.mxu0
        %v968 = vadd.f32 %v885, %v949
        %v969 = vadd.f32 %v886, %v951
        %v970 = vadd.f32 %v887, %v954
        %v971 = vadd.f32 %v888, %v956
        %v972 = vadd.f32 %v889, %v959
        %v973 = vadd.f32 %v890, %v961
        %v974 = vadd.f32 %v891, %v964
        %v975 = vadd.f32 %v892, %v966
        %v976 = vld [vmem:[%s810] sm:$0xf]
        %v977 = vld [vmem:[%s810 + $0x4] sm:$0x1]
        %v978 = vld [vmem:[%s810 + $0x8] sm:$0xf]
        %v979 = vld [vmem:[%s810 + $0xc] sm:$0x1]
        %v980 = vld [vmem:[%s810 + $0x10] sm:$0xf]
        %v981 = vld [vmem:[%s810 + $0x14] sm:$0x1]
        %v982 = vld [vmem:[%s810 + $0x18] sm:$0xf]
        %v983 = vld [vmem:[%s810 + $0x1c] sm:$0x1]
        %v984 = vld [vmem:[%s810 + $0x20] sm:$0xf]
        %v985 = vld [vmem:[%s810 + $0x24] sm:$0x1]
        %v986 = vld [vmem:[%s810 + $0x28] sm:$0xf]
        %v987 = vld [vmem:[%s810 + $0x2c] sm:$0x1]
        %v988 = vld [vmem:[%s810 + $0x30] sm:$0xf]
        %v989 = vld [vmem:[%s810 + $0x34] sm:$0x1]
        %v990 = vld [vmem:[%s810 + $0x38] sm:$0xf]
        %v991 = vld [vmem:[%s810 + $0x3c] sm:$0x1]
        %v993 = vshrl.u32 %v976, 16
        %v995 = vrot.slane %v993, 4
        %v996 = vshll.u32 %v976, 16
        %v998 = vrot.slane %v996, 5
        %v999 = vor.u32 %v995, %v998
        %v1000 = vrot.slane %v999, 4
        %v1002 = vshll.u32 %v977, 16
        %v1004 = vrot.slane %v1002, 5
        %v1005 = vsel %vm437, %v1000, %v1004
        %v1007 = vshrl.u32 %v978, 16
        %v1009 = vrot.slane %v1007, 4
        %v1010 = vshll.u32 %v978, 16
        %v1012 = vrot.slane %v1010, 5
        %v1013 = vor.u32 %v1009, %v1012
        %v1014 = vrot.slane %v1013, 4
        %v1016 = vshll.u32 %v979, 16
        %v1018 = vrot.slane %v1016, 5
        %v1019 = vsel %vm437, %v1014, %v1018
        %v1021 = vshrl.u32 %v980, 16
        %v1023 = vrot.slane %v1021, 4
        %v1024 = vshll.u32 %v980, 16
        %v1026 = vrot.slane %v1024, 5
        %v1027 = vor.u32 %v1023, %v1026
        %v1028 = vrot.slane %v1027, 4
        %v1030 = vshll.u32 %v981, 16
        %v1032 = vrot.slane %v1030, 5
        %v1033 = vsel %vm437, %v1028, %v1032
        %v1035 = vshrl.u32 %v982, 16
        %v1037 = vrot.slane %v1035, 4
        %v1038 = vshll.u32 %v982, 16
        %v1040 = vrot.slane %v1038, 5
        %v1041 = vor.u32 %v1037, %v1040
        %v1042 = vrot.slane %v1041, 4
        %v1044 = vshll.u32 %v983, 16
        %v1046 = vrot.slane %v1044, 5
        %v1047 = vsel %vm437, %v1042, %v1046
        %v1049 = vshrl.u32 %v984, 16
        %v1051 = vrot.slane %v1049, 4
        %v1052 = vshll.u32 %v984, 16
        %v1054 = vrot.slane %v1052, 5
        %v1055 = vor.u32 %v1051, %v1054
        %v1056 = vrot.slane %v1055, 4
        %v1058 = vshll.u32 %v985, 16
        %v1060 = vrot.slane %v1058, 5
        %v1061 = vsel %vm437, %v1056, %v1060
        %v1063 = vshrl.u32 %v986, 16
        %v1065 = vrot.slane %v1063, 4
        %v1066 = vshll.u32 %v986, 16
        %v1068 = vrot.slane %v1066, 5
        %v1069 = vor.u32 %v1065, %v1068
        %v1070 = vrot.slane %v1069, 4
        %v1072 = vshll.u32 %v987, 16
        %v1074 = vrot.slane %v1072, 5
        %v1075 = vsel %vm437, %v1070, %v1074
        %v1077 = vshrl.u32 %v988, 16
        %v1079 = vrot.slane %v1077, 4
        %v1080 = vshll.u32 %v988, 16
        %v1082 = vrot.slane %v1080, 5
        %v1083 = vor.u32 %v1079, %v1082
        %v1084 = vrot.slane %v1083, 4
        %v1086 = vshll.u32 %v989, 16
        %v1088 = vrot.slane %v1086, 5
        %v1089 = vsel %vm437, %v1084, %v1088
        %v1091 = vshrl.u32 %v990, 16
        %v1093 = vrot.slane %v1091, 4
        %v1094 = vshll.u32 %v990, 16
        %v1096 = vrot.slane %v1094, 5
        %v1097 = vor.u32 %v1093, %v1096
        %v1098 = vrot.slane %v1097, 4
        %v1100 = vshll.u32 %v991, 16
        %v1102 = vrot.slane %v1100, 5
        %v1103 = vsel %vm437, %v1098, %v1102
        %s1104 = scalar_lea.vmem %s264, 12
        %v1105 = vld [vmem:[%s1104] sm:$0x3]
        %v1106 = vunpack.c.l.b16 %v1005
        %v1107 = vunpack.c.l.b16 %v1019
        %v1108 = vunpack.c.l.b16 %v1033
        %v1109 = vunpack.c.l.b16 %v1047
        %v1110 = vunpack.c.l.b16 %v1061
        %v1111 = vunpack.c.l.b16 %v1075
        %v1112 = vunpack.c.l.b16 %v1089
        %v1113 = vunpack.c.l.b16 %v1103
        %v1114 = vpack.c.b16 %v1107, %v1106
        %v1115 = vpack.c.b16 %v1109, %v1108
        %v1116 = vpack.c.b16 %v1111, %v1110
        %v1117 = vpack.c.b16 %v1113, %v1112
        %v1119 = vsel %vm309, %v1114, 0
        %v1122 = vsel %vm309, %v1115, 0
        %v1125 = vsel %vm309, %v1116, 0
        %v1128 = vsel %vm309, %v1117, 0
        %v1131 = vsel %vm322, %v1105, 0
        %1133 = vmatpush.bf16.msra.mxu0 0
        %1134 = vmatpush.bf16.msra.mxu0 0
        %1135 = vmatpush.bf16.msra.mxu0 0
        %1136 = vmatpush.bf16.msra.mxu0 0
        %1137 = vmatpush.bf16.msra.mxu0 0
        %1138 = vmatpush.bf16.msra.mxu0 0
        %1139 = vmatpush.bf16.msra.mxu0 0
        %1140 = vmatpush.bf16.msra.mxu0 %v1131
        %1141 = vmatmul.bf16.gmra.mxu0 %v1119
        %v1142 = vpop.f32.mrf.mxu0
        %v1143 = vadd.f32 0.0, %v1142
        %v1144 = vpop.f32.mrf.mxu0
        %v1145 = vadd.f32 0.0, %v1144
        %1146 = vmatmul.bf16.gmra.mxu0 %v1122
        %v1147 = vpop.f32.mrf.mxu0
        %v1148 = vadd.f32 0.0, %v1147
        %v1149 = vpop.f32.mrf.mxu0
        %v1150 = vadd.f32 0.0, %v1149
        %1151 = vmatmul.bf16.gmra.mxu0 %v1125
        %v1152 = vpop.f32.mrf.mxu0
        %v1153 = vadd.f32 0.0, %v1152
        %v1154 = vpop.f32.mrf.mxu0
        %v1155 = vadd.f32 0.0, %v1154
        %1156 = vmatmul.bf16.gmra.mxu0 %v1128
        %v1157 = vpop.f32.mrf.mxu0
        %v1158 = vadd.f32 0.0, %v1157
        %v1159 = vpop.f32.mrf.mxu0
        %v1160 = vadd.f32 0.0, %v1159
        %1161 = vdwg.mxu0
        %v1162 = vadd.f32 %v968, %v1143
        %v1163 = vadd.f32 %v969, %v1145
        %v1164 = vadd.f32 %v970, %v1148
        %v1165 = vadd.f32 %v971, %v1150
        %v1166 = vadd.f32 %v972, %v1153
        %v1167 = vadd.f32 %v973, %v1155
        %v1168 = vadd.f32 %v974, %v1158
        %v1169 = vadd.f32 %v975, %v1160
        %v1170 = vld [vmem:[%s893] sm:$0xf]
        %v1171 = vld [vmem:[%s893 + $0x4] sm:$0x1]
        %v1172 = vld [vmem:[%s893 + $0x8] sm:$0xf]
        %v1173 = vld [vmem:[%s893 + $0xc] sm:$0x1]
        %v1174 = vld [vmem:[%s893 + $0x10] sm:$0xf]
        %v1175 = vld [vmem:[%s893 + $0x14] sm:$0x1]
        %v1176 = vld [vmem:[%s893 + $0x18] sm:$0xf]
        %v1177 = vld [vmem:[%s893 + $0x1c] sm:$0x1]
        %v1178 = vld [vmem:[%s893 + $0x20] sm:$0xf]
        %v1179 = vld [vmem:[%s893 + $0x24] sm:$0x1]
        %v1180 = vld [vmem:[%s893 + $0x28] sm:$0xf]
        %v1181 = vld [vmem:[%s893 + $0x2c] sm:$0x1]
        %v1182 = vld [vmem:[%s893 + $0x30] sm:$0xf]
        %v1183 = vld [vmem:[%s893 + $0x34] sm:$0x1]
        %v1184 = vld [vmem:[%s893 + $0x38] sm:$0xf]
        %v1185 = vld [vmem:[%s893 + $0x3c] sm:$0x1]
        %v1187 = vshrl.u32 %v1170, 16
        %v1189 = vrot.slane %v1187, 4
        %v1190 = vshll.u32 %v1170, 16
        %v1192 = vrot.slane %v1190, 5
        %v1193 = vor.u32 %v1189, %v1192
        %v1194 = vrot.slane %v1193, 4
        %v1196 = vshll.u32 %v1171, 16
        %v1198 = vrot.slane %v1196, 5
        %v1199 = vsel %vm437, %v1194, %v1198
        %v1201 = vshrl.u32 %v1172, 16
        %v1203 = vrot.slane %v1201, 4
        %v1204 = vshll.u32 %v1172, 16
        %v1206 = vrot.slane %v1204, 5
        %v1207 = vor.u32 %v1203, %v1206
        %v1208 = vrot.slane %v1207, 4
        %v1210 = vshll.u32 %v1173, 16
        %v1212 = vrot.slane %v1210, 5
        %v1213 = vsel %vm437, %v1208, %v1212
        %v1215 = vshrl.u32 %v1174, 16
        %v1217 = vrot.slane %v1215, 4
        %v1218 = vshll.u32 %v1174, 16
        %v1220 = vrot.slane %v1218, 5
        %v1221 = vor.u32 %v1217, %v1220
        %v1222 = vrot.slane %v1221, 4
        %v1224 = vshll.u32 %v1175, 16
        %v1226 = vrot.slane %v1224, 5
        %v1227 = vsel %vm437, %v1222, %v1226
        %v1229 = vshrl.u32 %v1176, 16
        %v1231 = vrot.slane %v1229, 4
        %v1232 = vshll.u32 %v1176, 16
        %v1234 = vrot.slane %v1232, 5
        %v1235 = vor.u32 %v1231, %v1234
        %v1236 = vrot.slane %v1235, 4
        %v1238 = vshll.u32 %v1177, 16
        %v1240 = vrot.slane %v1238, 5
        %v1241 = vsel %vm437, %v1236, %v1240
        %v1243 = vshrl.u32 %v1178, 16
        %v1245 = vrot.slane %v1243, 4
        %v1246 = vshll.u32 %v1178, 16
        %v1248 = vrot.slane %v1246, 5
        %v1249 = vor.u32 %v1245, %v1248
        %v1250 = vrot.slane %v1249, 4
        %v1252 = vshll.u32 %v1179, 16
        %v1254 = vrot.slane %v1252, 5
        %v1255 = vsel %vm437, %v1250, %v1254
        %v1257 = vshrl.u32 %v1180, 16
        %v1259 = vrot.slane %v1257, 4
        %v1260 = vshll.u32 %v1180, 16
        %v1262 = vrot.slane %v1260, 5
        %v1263 = vor.u32 %v1259, %v1262
        %v1264 = vrot.slane %v1263, 4
        %v1266 = vshll.u32 %v1181, 16
        %v1268 = vrot.slane %v1266, 5
        %v1269 = vsel %vm437, %v1264, %v1268
        %v1271 = vshrl.u32 %v1182, 16
        %v1273 = vrot.slane %v1271, 4
        %v1274 = vshll.u32 %v1182, 16
        %v1276 = vrot.slane %v1274, 5
        %v1277 = vor.u32 %v1273, %v1276
        %v1278 = vrot.slane %v1277, 4
        %v1280 = vshll.u32 %v1183, 16
        %v1282 = vrot.slane %v1280, 5
        %v1283 = vsel %vm437, %v1278, %v1282
        %v1285 = vshrl.u32 %v1184, 16
        %v1287 = vrot.slane %v1285, 4
        %v1288 = vshll.u32 %v1184, 16
        %v1290 = vrot.slane %v1288, 5
        %v1291 = vor.u32 %v1287, %v1290
        %v1292 = vrot.slane %v1291, 4
        %v1294 = vshll.u32 %v1185, 16
        %v1296 = vrot.slane %v1294, 5
        %v1297 = vsel %vm437, %v1292, %v1296
        %s1298 = scalar_lea.vmem %s264, 14
        %v1299 = vld [vmem:[%s1298] sm:$0x3]
        %v1300 = vunpack.c.l.b16 %v1199
        %v1301 = vunpack.c.l.b16 %v1213
        %v1302 = vunpack.c.l.b16 %v1227
        %v1303 = vunpack.c.l.b16 %v1241
        %v1304 = vunpack.c.l.b16 %v1255
        %v1305 = vunpack.c.l.b16 %v1269
        %v1306 = vunpack.c.l.b16 %v1283
        %v1307 = vunpack.c.l.b16 %v1297
        %v1308 = vpack.c.b16 %v1301, %v1300
        %v1309 = vpack.c.b16 %v1303, %v1302
        %v1310 = vpack.c.b16 %v1305, %v1304
        %v1311 = vpack.c.b16 %v1307, %v1306
        %v1313 = vsel %vm309, %v1308, 0
        %v1316 = vsel %vm309, %v1309, 0
        %v1319 = vsel %vm309, %v1310, 0
        %v1322 = vsel %vm309, %v1311, 0
        %v1325 = vsel %vm322, %v1299, 0
        %1327 = vmatpush.bf16.msra.mxu0 0
        %1328 = vmatpush.bf16.msra.mxu0 0
        %1329 = vmatpush.bf16.msra.mxu0 0
        %1330 = vmatpush.bf16.msra.mxu0 0
        %1331 = vmatpush.bf16.msra.mxu0 0
        %1332 = vmatpush.bf16.msra.mxu0 0
        %1333 = vmatpush.bf16.msra.mxu0 0
        %1334 = vmatpush.bf16.msra.mxu0 %v1325
        %1335 = vmatmul.bf16.gmra.mxu0 %v1313
        %v1336 = vpop.f32.mrf.mxu0
        %v1337 = vadd.f32 0.0, %v1336
        %v1338 = vpop.f32.mrf.mxu0
        %v1339 = vadd.f32 0.0, %v1338
        %1340 = vmatmul.bf16.gmra.mxu0 %v1316
        %v1341 = vpop.f32.mrf.mxu0
        %v1342 = vadd.f32 0.0, %v1341
        %v1343 = vpop.f32.mrf.mxu0
        %v1344 = vadd.f32 0.0, %v1343
        %1345 = vmatmul.bf16.gmra.mxu0 %v1319
        %v1346 = vpop.f32.mrf.mxu0
        %v1347 = vadd.f32 0.0, %v1346
        %v1348 = vpop.f32.mrf.mxu0
        %v1349 = vadd.f32 0.0, %v1348
        %1350 = vmatmul.bf16.gmra.mxu0 %v1322
        %v1351 = vpop.f32.mrf.mxu0
        %v1352 = vadd.f32 0.0, %v1351
        %v1353 = vpop.f32.mrf.mxu0
        %v1354 = vadd.f32 0.0, %v1353
        %1355 = vdwg.mxu0
        %v1356 = vadd.f32 %v1162, %v1337
        %v1357 = vadd.f32 %v1163, %v1339
        %v1358 = vadd.f32 %v1164, %v1342
        %v1359 = vadd.f32 %v1165, %v1344
        %v1360 = vadd.f32 %v1166, %v1347
        %v1361 = vadd.f32 %v1167, %v1349
        %v1362 = vadd.f32 %v1168, %v1352
        %v1363 = vadd.f32 %v1169, %v1354
        %s1364 = scalar_lea.vmem %s259, 8
        %v1365 = vld [vmem:[%s1364] sm:$0xf]
        %v1366 = vld [vmem:[%s1364 + $0x8] sm:$0xf]
        %v1367 = vld [vmem:[%s1364 + $0x10] sm:$0xf]
        %v1368 = vld [vmem:[%s1364 + $0x18] sm:$0xf]
        %v1369 = vld [vmem:[%s1364 + $0x20] sm:$0xf]
        %v1370 = vld [vmem:[%s1364 + $0x28] sm:$0xf]
        %v1371 = vld [vmem:[%s1364 + $0x30] sm:$0xf]
        %v1372 = vld [vmem:[%s1364 + $0x38] sm:$0xf]
        %s1373 = scalar_lea.vmem %s264, 16
        %v1374 = vld [vmem:[%s1373] sm:$0x3]
        %v1383 = vunpack.c.l.b16 %v1365
        %v1384 = vunpack.c.l.b16 %v1366
        %v1385 = vunpack.c.l.b16 %v1367
        %v1386 = vunpack.c.l.b16 %v1368
        %v1387 = vunpack.c.l.b16 %v1369
        %v1388 = vunpack.c.l.b16 %v1370
        %v1389 = vunpack.c.l.b16 %v1371
        %v1390 = vunpack.c.l.b16 %v1372
        %v1391 = vpack.c.b16 %v1384, %v1383
        %v1392 = vpack.c.b16 %v1386, %v1385
        %v1393 = vpack.c.b16 %v1388, %v1387
        %v1394 = vpack.c.b16 %v1390, %v1389
        %v1396 = vsel %vm309, %v1391, 0
        %v1399 = vsel %vm309, %v1392, 0
        %v1402 = vsel %vm309, %v1393, 0
        %v1405 = vsel %vm309, %v1394, 0
        %v1408 = vsel %vm322, %v1374, 0
        %1410 = vmatpush.bf16.msra.mxu0 0
        %1411 = vmatpush.bf16.msra.mxu0 0
        %1412 = vmatpush.bf16.msra.mxu0 0
        %1413 = vmatpush.bf16.msra.mxu0 0
        %1414 = vmatpush.bf16.msra.mxu0 0
        %1415 = vmatpush.bf16.msra.mxu0 0
        %1416 = vmatpush.bf16.msra.mxu0 0
        %1417 = vmatpush.bf16.msra.mxu0 %v1408
        %1418 = vmatmul.bf16.gmra.mxu0 %v1396
        %v1419 = vpop.f32.mrf.mxu0
        %v1420 = vadd.f32 0.0, %v1419
        %v1421 = vpop.f32.mrf.mxu0
        %v1422 = vadd.f32 0.0, %v1421
        %1423 = vmatmul.bf16.gmra.mxu0 %v1399
        %v1424 = vpop.f32.mrf.mxu0
        %v1425 = vadd.f32 0.0, %v1424
        %v1426 = vpop.f32.mrf.mxu0
        %v1427 = vadd.f32 0.0, %v1426
        %1428 = vmatmul.bf16.gmra.mxu0 %v1402
        %v1429 = vpop.f32.mrf.mxu0
        %v1430 = vadd.f32 0.0, %v1429
        %v1431 = vpop.f32.mrf.mxu0
        %v1432 = vadd.f32 0.0, %v1431
        %1433 = vmatmul.bf16.gmra.mxu0 %v1405
        %v1434 = vpop.f32.mrf.mxu0
        %v1435 = vadd.f32 0.0, %v1434
        %v1436 = vpop.f32.mrf.mxu0
        %v1437 = vadd.f32 0.0, %v1436
        %1438 = vdwg.mxu0
        %v1439 = vadd.f32 %v1356, %v1420
        %v1440 = vadd.f32 %v1357, %v1422
        %v1441 = vadd.f32 %v1358, %v1425
        %v1442 = vadd.f32 %v1359, %v1427
        %v1443 = vadd.f32 %v1360, %v1430
        %v1444 = vadd.f32 %v1361, %v1432
        %v1445 = vadd.f32 %v1362, %v1435
        %v1446 = vadd.f32 %v1363, %v1437
        %s1447 = scalar_lea.vmem %s259, 80
        %v1448 = vld [vmem:[%s1447] sm:$0xf]
        %v1449 = vld [vmem:[%s1447 + $0x8] sm:$0xf]
        %v1450 = vld [vmem:[%s1447 + $0x10] sm:$0xf]
        %v1451 = vld [vmem:[%s1447 + $0x18] sm:$0xf]
        %v1452 = vld [vmem:[%s1447 + $0x20] sm:$0xf]
        %v1453 = vld [vmem:[%s1447 + $0x28] sm:$0xf]
        %v1454 = vld [vmem:[%s1447 + $0x30] sm:$0xf]
        %v1455 = vld [vmem:[%s1447 + $0x38] sm:$0xf]
        %s1456 = scalar_lea.vmem %s264, 18
        %v1457 = vld [vmem:[%s1456] sm:$0x3]
        %v1466 = vunpack.c.l.b16 %v1448
        %v1467 = vunpack.c.l.b16 %v1449
        %v1468 = vunpack.c.l.b16 %v1450
        %v1469 = vunpack.c.l.b16 %v1451
        %v1470 = vunpack.c.l.b16 %v1452
        %v1471 = vunpack.c.l.b16 %v1453
        %v1472 = vunpack.c.l.b16 %v1454
        %v1473 = vunpack.c.l.b16 %v1455
        %v1474 = vpack.c.b16 %v1467, %v1466
        %v1475 = vpack.c.b16 %v1469, %v1468
        %v1476 = vpack.c.b16 %v1471, %v1470
        %v1477 = vpack.c.b16 %v1473, %v1472
        %v1479 = vsel %vm309, %v1474, 0
        %v1482 = vsel %vm309, %v1475, 0
        %v1485 = vsel %vm309, %v1476, 0
        %v1488 = vsel %vm309, %v1477, 0
        %v1491 = vsel %vm322, %v1457, 0
        %1493 = vmatpush.bf16.msra.mxu0 0
        %1494 = vmatpush.bf16.msra.mxu0 0
        %1495 = vmatpush.bf16.msra.mxu0 0
        %1496 = vmatpush.bf16.msra.mxu0 0
        %1497 = vmatpush.bf16.msra.mxu0 0
        %1498 = vmatpush.bf16.msra.mxu0 0
        %1499 = vmatpush.bf16.msra.mxu0 0
        %1500 = vmatpush.bf16.msra.mxu0 %v1491
        %1501 = vmatmul.bf16.gmra.mxu0 %v1479
        %v1502 = vpop.f32.mrf.mxu0
        %v1503 = vadd.f32 0.0, %v1502
        %v1504 = vpop.f32.mrf.mxu0
        %v1505 = vadd.f32 0.0, %v1504
        %1506 = vmatmul.bf16.gmra.mxu0 %v1482
        %v1507 = vpop.f32.mrf.mxu0
        %v1508 = vadd.f32 0.0, %v1507
        %v1509 = vpop.f32.mrf.mxu0
        %v1510 = vadd.f32 0.0, %v1509
        %1511 = vmatmul.bf16.gmra.mxu0 %v1485
        %v1512 = vpop.f32.mrf.mxu0
        %v1513 = vadd.f32 0.0, %v1512
        %v1514 = vpop.f32.mrf.mxu0
        %v1515 = vadd.f32 0.0, %v1514
        %1516 = vmatmul.bf16.gmra.mxu0 %v1488
        %v1517 = vpop.f32.mrf.mxu0
        %v1518 = vadd.f32 0.0, %v1517
        %v1519 = vpop.f32.mrf.mxu0
        %v1520 = vadd.f32 0.0, %v1519
        %1521 = vdwg.mxu0
        %v1522 = vadd.f32 %v1439, %v1503
        %v1523 = vadd.f32 %v1440, %v1505
        %v1524 = vadd.f32 %v1441, %v1508
        %v1525 = vadd.f32 %v1442, %v1510
        %v1526 = vadd.f32 %v1443, %v1513
        %v1527 = vadd.f32 %v1444, %v1515
        %v1528 = vadd.f32 %v1445, %v1518
        %v1529 = vadd.f32 %v1446, %v1520
        %v1530 = vld [vmem:[%s1364] sm:$0xf]
        %v1531 = vld [vmem:[%s1364 + $0x4] sm:$0x1]
        %v1532 = vld [vmem:[%s1364 + $0x8] sm:$0xf]
        %v1533 = vld [vmem:[%s1364 + $0xc] sm:$0x1]
        %v1534 = vld [vmem:[%s1364 + $0x10] sm:$0xf]
        %v1535 = vld [vmem:[%s1364 + $0x14] sm:$0x1]
        %v1536 = vld [vmem:[%s1364 + $0x18] sm:$0xf]
        %v1537 = vld [vmem:[%s1364 + $0x1c] sm:$0x1]
        %v1538 = vld [vmem:[%s1364 + $0x20] sm:$0xf]
        %v1539 = vld [vmem:[%s1364 + $0x24] sm:$0x1]
        %v1540 = vld [vmem:[%s1364 + $0x28] sm:$0xf]
        %v1541 = vld [vmem:[%s1364 + $0x2c] sm:$0x1]
        %v1542 = vld [vmem:[%s1364 + $0x30] sm:$0xf]
        %v1543 = vld [vmem:[%s1364 + $0x34] sm:$0x1]
        %v1544 = vld [vmem:[%s1364 + $0x38] sm:$0xf]
        %v1545 = vld [vmem:[%s1364 + $0x3c] sm:$0x1]
        %v1547 = vshrl.u32 %v1530, 16
        %v1549 = vrot.slane %v1547, 4
        %v1550 = vshll.u32 %v1530, 16
        %v1552 = vrot.slane %v1550, 5
        %v1553 = vor.u32 %v1549, %v1552
        %v1554 = vrot.slane %v1553, 4
        %v1556 = vshll.u32 %v1531, 16
        %v1558 = vrot.slane %v1556, 5
        %v1559 = vsel %vm437, %v1554, %v1558
        %v1561 = vshrl.u32 %v1532, 16
        %v1563 = vrot.slane %v1561, 4
        %v1564 = vshll.u32 %v1532, 16
        %v1566 = vrot.slane %v1564, 5
        %v1567 = vor.u32 %v1563, %v1566
        %v1568 = vrot.slane %v1567, 4
        %v1570 = vshll.u32 %v1533, 16
        %v1572 = vrot.slane %v1570, 5
        %v1573 = vsel %vm437, %v1568, %v1572
        %v1575 = vshrl.u32 %v1534, 16
        %v1577 = vrot.slane %v1575, 4
        %v1578 = vshll.u32 %v1534, 16
        %v1580 = vrot.slane %v1578, 5
        %v1581 = vor.u32 %v1577, %v1580
        %v1582 = vrot.slane %v1581, 4
        %v1584 = vshll.u32 %v1535, 16
        %v1586 = vrot.slane %v1584, 5
        %v1587 = vsel %vm437, %v1582, %v1586
        %v1589 = vshrl.u32 %v1536, 16
        %v1591 = vrot.slane %v1589, 4
        %v1592 = vshll.u32 %v1536, 16
        %v1594 = vrot.slane %v1592, 5
        %v1595 = vor.u32 %v1591, %v1594
        %v1596 = vrot.slane %v1595, 4
        %v1598 = vshll.u32 %v1537, 16
        %v1600 = vrot.slane %v1598, 5
        %v1601 = vsel %vm437, %v1596, %v1600
        %v1603 = vshrl.u32 %v1538, 16
        %v1605 = vrot.slane %v1603, 4
        %v1606 = vshll.u32 %v1538, 16
        %v1608 = vrot.slane %v1606, 5
        %v1609 = vor.u32 %v1605, %v1608
        %v1610 = vrot.slane %v1609, 4
        %v1612 = vshll.u32 %v1539, 16
        %v1614 = vrot.slane %v1612, 5
        %v1615 = vsel %vm437, %v1610, %v1614
        %v1617 = vshrl.u32 %v1540, 16
        %v1619 = vrot.slane %v1617, 4
        %v1620 = vshll.u32 %v1540, 16
        %v1622 = vrot.slane %v1620, 5
        %v1623 = vor.u32 %v1619, %v1622
        %v1624 = vrot.slane %v1623, 4
        %v1626 = vshll.u32 %v1541, 16
        %v1628 = vrot.slane %v1626, 5
        %v1629 = vsel %vm437, %v1624, %v1628
        %v1631 = vshrl.u32 %v1542, 16
        %v1633 = vrot.slane %v1631, 4
        %v1634 = vshll.u32 %v1542, 16
        %v1636 = vrot.slane %v1634, 5
        %v1637 = vor.u32 %v1633, %v1636
        %v1638 = vrot.slane %v1637, 4
        %v1640 = vshll.u32 %v1543, 16
        %v1642 = vrot.slane %v1640, 5
        %v1643 = vsel %vm437, %v1638, %v1642
        %v1645 = vshrl.u32 %v1544, 16
        %v1647 = vrot.slane %v1645, 4
        %v1648 = vshll.u32 %v1544, 16
        %v1650 = vrot.slane %v1648, 5
        %v1651 = vor.u32 %v1647, %v1650
        %v1652 = vrot.slane %v1651, 4
        %v1654 = vshll.u32 %v1545, 16
        %v1656 = vrot.slane %v1654, 5
        %v1657 = vsel %vm437, %v1652, %v1656
        %s1658 = scalar_lea.vmem %s264, 20
        %v1659 = vld [vmem:[%s1658] sm:$0x3]
        %v1660 = vunpack.c.l.b16 %v1559
        %v1661 = vunpack.c.l.b16 %v1573
        %v1662 = vunpack.c.l.b16 %v1587
        %v1663 = vunpack.c.l.b16 %v1601
        %v1664 = vunpack.c.l.b16 %v1615
        %v1665 = vunpack.c.l.b16 %v1629
        %v1666 = vunpack.c.l.b16 %v1643
        %v1667 = vunpack.c.l.b16 %v1657
        %v1668 = vpack.c.b16 %v1661, %v1660
        %v1669 = vpack.c.b16 %v1663, %v1662
        %v1670 = vpack.c.b16 %v1665, %v1664
        %v1671 = vpack.c.b16 %v1667, %v1666
        %v1673 = vsel %vm309, %v1668, 0
        %v1676 = vsel %vm309, %v1669, 0
        %v1679 = vsel %vm309, %v1670, 0
        %v1682 = vsel %vm309, %v1671, 0
        %v1685 = vsel %vm322, %v1659, 0
        %1687 = vmatpush.bf16.msra.mxu0 0
        %1688 = vmatpush.bf16.msra.mxu0 0
        %1689 = vmatpush.bf16.msra.mxu0 0
        %1690 = vmatpush.bf16.msra.mxu0 0
        %1691 = vmatpush.bf16.msra.mxu0 0
        %1692 = vmatpush.bf16.msra.mxu0 0
        %1693 = vmatpush.bf16.msra.mxu0 0
        %1694 = vmatpush.bf16.msra.mxu0 %v1685
        %1695 = vmatmul.bf16.gmra.mxu0 %v1673
        %v1696 = vpop.f32.mrf.mxu0
        %v1697 = vadd.f32 0.0, %v1696
        %v1698 = vpop.f32.mrf.mxu0
        %v1699 = vadd.f32 0.0, %v1698
        %1700 = vmatmul.bf16.gmra.mxu0 %v1676
        %v1701 = vpop.f32.mrf.mxu0
        %v1702 = vadd.f32 0.0, %v1701
        %v1703 = vpop.f32.mrf.mxu0
        %v1704 = vadd.f32 0.0, %v1703
        %1705 = vmatmul.bf16.gmra.mxu0 %v1679
        %v1706 = vpop.f32.mrf.mxu0
        %v1707 = vadd.f32 0.0, %v1706
        %v1708 = vpop.f32.mrf.mxu0
        %v1709 = vadd.f32 0.0, %v1708
        %1710 = vmatmul.bf16.gmra.mxu0 %v1682
        %v1711 = vpop.f32.mrf.mxu0
        %v1712 = vadd.f32 0.0, %v1711
        %v1713 = vpop.f32.mrf.mxu0
        %v1714 = vadd.f32 0.0, %v1713
        %1715 = vdwg.mxu0
        %v1716 = vadd.f32 %v1522, %v1697
        %v1717 = vadd.f32 %v1523, %v1699
        %v1718 = vadd.f32 %v1524, %v1702
        %v1719 = vadd.f32 %v1525, %v1704
        %v1720 = vadd.f32 %v1526, %v1707
        %v1721 = vadd.f32 %v1527, %v1709
        %v1722 = vadd.f32 %v1528, %v1712
        %v1723 = vadd.f32 %v1529, %v1714
        %v1724 = vld [vmem:[%s1447] sm:$0xf]
        %v1725 = vld [vmem:[%s1447 + $0x4] sm:$0x1]
        %v1726 = vld [vmem:[%s1447 + $0x8] sm:$0xf]
        %v1727 = vld [vmem:[%s1447 + $0xc] sm:$0x1]
        %v1728 = vld [vmem:[%s1447 + $0x10] sm:$0xf]
        %v1729 = vld [vmem:[%s1447 + $0x14] sm:$0x1]
        %v1730 = vld [vmem:[%s1447 + $0x18] sm:$0xf]
        %v1731 = vld [vmem:[%s1447 + $0x1c] sm:$0x1]
        %v1732 = vld [vmem:[%s1447 + $0x20] sm:$0xf]
        %v1733 = vld [vmem:[%s1447 + $0x24] sm:$0x1]
        %v1734 = vld [vmem:[%s1447 + $0x28] sm:$0xf]
        %v1735 = vld [vmem:[%s1447 + $0x2c] sm:$0x1]
        %v1736 = vld [vmem:[%s1447 + $0x30] sm:$0xf]
        %v1737 = vld [vmem:[%s1447 + $0x34] sm:$0x1]
        %v1738 = vld [vmem:[%s1447 + $0x38] sm:$0xf]
        %v1739 = vld [vmem:[%s1447 + $0x3c] sm:$0x1]
        %v1741 = vshrl.u32 %v1724, 16
        %v1743 = vrot.slane %v1741, 4
        %v1744 = vshll.u32 %v1724, 16
        %v1746 = vrot.slane %v1744, 5
        %v1747 = vor.u32 %v1743, %v1746
        %v1748 = vrot.slane %v1747, 4
        %v1750 = vshll.u32 %v1725, 16
        %v1752 = vrot.slane %v1750, 5
        %v1753 = vsel %vm437, %v1748, %v1752
        %v1755 = vshrl.u32 %v1726, 16
        %v1757 = vrot.slane %v1755, 4
        %v1758 = vshll.u32 %v1726, 16
        %v1760 = vrot.slane %v1758, 5
        %v1761 = vor.u32 %v1757, %v1760
        %v1762 = vrot.slane %v1761, 4
        %v1764 = vshll.u32 %v1727, 16
        %v1766 = vrot.slane %v1764, 5
        %v1767 = vsel %vm437, %v1762, %v1766
        %v1769 = vshrl.u32 %v1728, 16
        %v1771 = vrot.slane %v1769, 4
        %v1772 = vshll.u32 %v1728, 16
        %v1774 = vrot.slane %v1772, 5
        %v1775 = vor.u32 %v1771, %v1774
        %v1776 = vrot.slane %v1775, 4
        %v1778 = vshll.u32 %v1729, 16
        %v1780 = vrot.slane %v1778, 5
        %v1781 = vsel %vm437, %v1776, %v1780
        %v1783 = vshrl.u32 %v1730, 16
        %v1785 = vrot.slane %v1783, 4
        %v1786 = vshll.u32 %v1730, 16
        %v1788 = vrot.slane %v1786, 5
        %v1789 = vor.u32 %v1785, %v1788
        %v1790 = vrot.slane %v1789, 4
        %v1792 = vshll.u32 %v1731, 16
        %v1794 = vrot.slane %v1792, 5
        %v1795 = vsel %vm437, %v1790, %v1794
        %v1797 = vshrl.u32 %v1732, 16
        %v1799 = vrot.slane %v1797, 4
        %v1800 = vshll.u32 %v1732, 16
        %v1802 = vrot.slane %v1800, 5
        %v1803 = vor.u32 %v1799, %v1802
        %v1804 = vrot.slane %v1803, 4
        %v1806 = vshll.u32 %v1733, 16
        %v1808 = vrot.slane %v1806, 5
        %v1809 = vsel %vm437, %v1804, %v1808
        %v1811 = vshrl.u32 %v1734, 16
        %v1813 = vrot.slane %v1811, 4
        %v1814 = vshll.u32 %v1734, 16
        %v1816 = vrot.slane %v1814, 5
        %v1817 = vor.u32 %v1813, %v1816
        %v1818 = vrot.slane %v1817, 4
        %v1820 = vshll.u32 %v1735, 16
        %v1822 = vrot.slane %v1820, 5
        %v1823 = vsel %vm437, %v1818, %v1822
        %v1825 = vshrl.u32 %v1736, 16
        %v1827 = vrot.slane %v1825, 4
        %v1828 = vshll.u32 %v1736, 16
        %v1830 = vrot.slane %v1828, 5
        %v1831 = vor.u32 %v1827, %v1830
        %v1832 = vrot.slane %v1831, 4
        %v1834 = vshll.u32 %v1737, 16
        %v1836 = vrot.slane %v1834, 5
        %v1837 = vsel %vm437, %v1832, %v1836
        %v1839 = vshrl.u32 %v1738, 16
        %v1841 = vrot.slane %v1839, 4
        %v1842 = vshll.u32 %v1738, 16
        %v1844 = vrot.slane %v1842, 5
        %v1845 = vor.u32 %v1841, %v1844
        %v1846 = vrot.slane %v1845, 4
        %v1848 = vshll.u32 %v1739, 16
        %v1850 = vrot.slane %v1848, 5
        %v1851 = vsel %vm437, %v1846, %v1850
        %s1852 = scalar_lea.vmem %s264, 22
        %v1853 = vld [vmem:[%s1852] sm:$0x3]
        %v1854 = vunpack.c.l.b16 %v1753
        %v1855 = vunpack.c.l.b16 %v1767
        %v1856 = vunpack.c.l.b16 %v1781
        %v1857 = vunpack.c.l.b16 %v1795
        %v1858 = vunpack.c.l.b16 %v1809
        %v1859 = vunpack.c.l.b16 %v1823
        %v1860 = vunpack.c.l.b16 %v1837
        %v1861 = vunpack.c.l.b16 %v1851
        %v1862 = vpack.c.b16 %v1855, %v1854
        %v1863 = vpack.c.b16 %v1857, %v1856
        %v1864 = vpack.c.b16 %v1859, %v1858
        %v1865 = vpack.c.b16 %v1861, %v1860
        %v1867 = vsel %vm309, %v1862, 0
        %v1870 = vsel %vm309, %v1863, 0
        %v1873 = vsel %vm309, %v1864, 0
        %v1876 = vsel %vm309, %v1865, 0
        %v1879 = vsel %vm322, %v1853, 0
        %1881 = vmatpush.bf16.msra.mxu0 0
        %1882 = vmatpush.bf16.msra.mxu0 0
        %1883 = vmatpush.bf16.msra.mxu0 0
        %1884 = vmatpush.bf16.msra.mxu0 0
        %1885 = vmatpush.bf16.msra.mxu0 0
        %1886 = vmatpush.bf16.msra.mxu0 0
        %1887 = vmatpush.bf16.msra.mxu0 0
        %1888 = vmatpush.bf16.msra.mxu0 %v1879
        %1889 = vmatmul.bf16.gmra.mxu0 %v1867
        %v1890 = vpop.f32.mrf.mxu0
        %v1891 = vadd.f32 0.0, %v1890
        %v1892 = vpop.f32.mrf.mxu0
        %v1893 = vadd.f32 0.0, %v1892
        %1894 = vmatmul.bf16.gmra.mxu0 %v1870
        %v1895 = vpop.f32.mrf.mxu0
        %v1896 = vadd.f32 0.0, %v1895
        %v1897 = vpop.f32.mrf.mxu0
        %v1898 = vadd.f32 0.0, %v1897
        %1899 = vmatmul.bf16.gmra.mxu0 %v1873
        %v1900 = vpop.f32.mrf.mxu0
        %v1901 = vadd.f32 0.0, %v1900
        %v1902 = vpop.f32.mrf.mxu0
        %v1903 = vadd.f32 0.0, %v1902
        %1904 = vmatmul.bf16.gmra.mxu0 %v1876
        %v1905 = vpop.f32.mrf.mxu0
        %v1906 = vadd.f32 0.0, %v1905
        %v1907 = vpop.f32.mrf.mxu0
        %v1908 = vadd.f32 0.0, %v1907
        %1909 = vdwg.mxu0
        %v1910 = vadd.f32 %v1716, %v1891
        %v1911 = vadd.f32 %v1717, %v1893
        %v1912 = vadd.f32 %v1718, %v1896
        %v1913 = vadd.f32 %v1719, %v1898
        %v1914 = vadd.f32 %v1720, %v1901
        %v1915 = vadd.f32 %v1721, %v1903
        %v1916 = vadd.f32 %v1722, %v1906
        %v1917 = vadd.f32 %v1723, %v1908
        %s1918 = scalar_lea.vmem %s259, 152
        %v1919 = vld [vmem:[%s1918] sm:$0xf]
        %v1920 = vld [vmem:[%s1918 + $0x8] sm:$0xf]
        %v1921 = vld [vmem:[%s1918 + $0x10] sm:$0xf]
        %v1922 = vld [vmem:[%s1918 + $0x18] sm:$0xf]
        %v1923 = vld [vmem:[%s1918 + $0x20] sm:$0xf]
        %v1924 = vld [vmem:[%s1918 + $0x28] sm:$0xf]
        %v1925 = vld [vmem:[%s1918 + $0x30] sm:$0xf]
        %v1926 = vld [vmem:[%s1918 + $0x38] sm:$0xf]
        %s1927 = scalar_lea.vmem %s264, 24
        %v1928 = vld [vmem:[%s1927] sm:$0x3]
        %v1937 = vunpack.c.l.b16 %v1919
        %v1938 = vunpack.c.l.b16 %v1920
        %v1939 = vunpack.c.l.b16 %v1921
        %v1940 = vunpack.c.l.b16 %v1922
        %v1941 = vunpack.c.l.b16 %v1923
        %v1942 = vunpack.c.l.b16 %v1924
        %v1943 = vunpack.c.l.b16 %v1925
        %v1944 = vunpack.c.l.b16 %v1926
        %v1945 = vpack.c.b16 %v1938, %v1937
        %v1946 = vpack.c.b16 %v1940, %v1939
        %v1947 = vpack.c.b16 %v1942, %v1941
        %v1948 = vpack.c.b16 %v1944, %v1943
        %v1950 = vsel %vm309, %v1945, 0
        %v1953 = vsel %vm309, %v1946, 0
        %v1956 = vsel %vm309, %v1947, 0
        %v1959 = vsel %vm309, %v1948, 0
        %v1962 = vsel %vm322, %v1928, 0
        %1964 = vmatpush.bf16.msra.mxu0 0
        %1965 = vmatpush.bf16.msra.mxu0 0
        %1966 = vmatpush.bf16.msra.mxu0 0
        %1967 = vmatpush.bf16.msra.mxu0 0
        %1968 = vmatpush.bf16.msra.mxu0 0
        %1969 = vmatpush.bf16.msra.mxu0 0
        %1970 = vmatpush.bf16.msra.mxu0 0
        %1971 = vmatpush.bf16.msra.mxu0 %v1962
        %1972 = vmatmul.bf16.gmra.mxu0 %v1950
        %v1973 = vpop.f32.mrf.mxu0
        %v1974 = vadd.f32 0.0, %v1973
        %v1975 = vpop.f32.mrf.mxu0
        %v1976 = vadd.f32 0.0, %v1975
        %1977 = vmatmul.bf16.gmra.mxu0 %v1953
        %v1978 = vpop.f32.mrf.mxu0
        %v1979 = vadd.f32 0.0, %v1978
        %v1980 = vpop.f32.mrf.mxu0
        %v1981 = vadd.f32 0.0, %v1980
        %1982 = vmatmul.bf16.gmra.mxu0 %v1956
        %v1983 = vpop.f32.mrf.mxu0
        %v1984 = vadd.f32 0.0, %v1983
        %v1985 = vpop.f32.mrf.mxu0
        %v1986 = vadd.f32 0.0, %v1985
        %1987 = vmatmul.bf16.gmra.mxu0 %v1959
        %v1988 = vpop.f32.mrf.mxu0
        %v1989 = vadd.f32 0.0, %v1988
        %v1990 = vpop.f32.mrf.mxu0
        %v1991 = vadd.f32 0.0, %v1990
        %1992 = vdwg.mxu0
        %v1993 = vadd.f32 %v1910, %v1974
        %v1994 = vadd.f32 %v1911, %v1976
        %v1995 = vadd.f32 %v1912, %v1979
        %v1996 = vadd.f32 %v1913, %v1981
        %v1997 = vadd.f32 %v1914, %v1984
        %v1998 = vadd.f32 %v1915, %v1986
        %v1999 = vadd.f32 %v1916, %v1989
        %v2000 = vadd.f32 %v1917, %v1991
        %s2001 = scalar_lea.vmem %s259, 224
        %v2002 = vld [vmem:[%s2001] sm:$0xf]
        %v2003 = vld [vmem:[%s2001 + $0x8] sm:$0xf]
        %v2004 = vld [vmem:[%s2001 + $0x10] sm:$0xf]
        %v2005 = vld [vmem:[%s2001 + $0x18] sm:$0xf]
        %v2006 = vld [vmem:[%s2001 + $0x20] sm:$0xf]
        %v2007 = vld [vmem:[%s2001 + $0x28] sm:$0xf]
        %v2008 = vld [vmem:[%s2001 + $0x30] sm:$0xf]
        %v2009 = vld [vmem:[%s2001 + $0x38] sm:$0xf]
        %s2010 = scalar_lea.vmem %s264, 26
        %v2011 = vld [vmem:[%s2010] sm:$0x3]
        %v2020 = vunpack.c.l.b16 %v2002
        %v2021 = vunpack.c.l.b16 %v2003
        %v2022 = vunpack.c.l.b16 %v2004
        %v2023 = vunpack.c.l.b16 %v2005
        %v2024 = vunpack.c.l.b16 %v2006
        %v2025 = vunpack.c.l.b16 %v2007
        %v2026 = vunpack.c.l.b16 %v2008
        %v2027 = vunpack.c.l.b16 %v2009
        %v2028 = vpack.c.b16 %v2021, %v2020
        %v2029 = vpack.c.b16 %v2023, %v2022
        %v2030 = vpack.c.b16 %v2025, %v2024
        %v2031 = vpack.c.b16 %v2027, %v2026
        %v2033 = vsel %vm309, %v2028, 0
        %v2036 = vsel %vm309, %v2029, 0
        %v2039 = vsel %vm309, %v2030, 0
        %v2042 = vsel %vm309, %v2031, 0
        %v2045 = vsel %vm322, %v2011, 0
        %2047 = vmatpush.bf16.msra.mxu0 0
        %2048 = vmatpush.bf16.msra.mxu0 0
        %2049 = vmatpush.bf16.msra.mxu0 0
        %2050 = vmatpush.bf16.msra.mxu0 0
        %2051 = vmatpush.bf16.msra.mxu0 0
        %2052 = vmatpush.bf16.msra.mxu0 0
        %2053 = vmatpush.bf16.msra.mxu0 0
        %2054 = vmatpush.bf16.msra.mxu0 %v2045
        %2055 = vmatmul.bf16.gmra.mxu0 %v2033
        %v2056 = vpop.f32.mrf.mxu0
        %v2057 = vadd.f32 0.0, %v2056
        %v2058 = vpop.f32.mrf.mxu0
        %v2059 = vadd.f32 0.0, %v2058
        %2060 = vmatmul.bf16.gmra.mxu0 %v2036
        %v2061 = vpop.f32.mrf.mxu0
        %v2062 = vadd.f32 0.0, %v2061
        %v2063 = vpop.f32.mrf.mxu0
        %v2064 = vadd.f32 0.0, %v2063
        %2065 = vmatmul.bf16.gmra.mxu0 %v2039
        %v2066 = vpop.f32.mrf.mxu0
        %v2067 = vadd.f32 0.0, %v2066
        %v2068 = vpop.f32.mrf.mxu0
        %v2069 = vadd.f32 0.0, %v2068
        %2070 = vmatmul.bf16.gmra.mxu0 %v2042
        %v2071 = vpop.f32.mrf.mxu0
        %v2072 = vadd.f32 0.0, %v2071
        %v2073 = vpop.f32.mrf.mxu0
        %v2074 = vadd.f32 0.0, %v2073
        %2075 = vdwg.mxu0
        %v2076 = vadd.f32 %v1993, %v2057
        %v2077 = vadd.f32 %v1994, %v2059
        %v2078 = vadd.f32 %v1995, %v2062
        %v2079 = vadd.f32 %v1996, %v2064
        %v2080 = vadd.f32 %v1997, %v2067
        %v2081 = vadd.f32 %v1998, %v2069
        %v2082 = vadd.f32 %v1999, %v2072
        %v2083 = vadd.f32 %v2000, %v2074
        %v2084 = vld [vmem:[%s1918] sm:$0xf]
        %v2085 = vld [vmem:[%s1918 + $0x4] sm:$0x1]
        %v2086 = vld [vmem:[%s1918 + $0x8] sm:$0xf]
        %v2087 = vld [vmem:[%s1918 + $0xc] sm:$0x1]
        %v2088 = vld [vmem:[%s1918 + $0x10] sm:$0xf]
        %v2089 = vld [vmem:[%s1918 + $0x14] sm:$0x1]
        %v2090 = vld [vmem:[%s1918 + $0x18] sm:$0xf]
        %v2091 = vld [vmem:[%s1918 + $0x1c] sm:$0x1]
        %v2092 = vld [vmem:[%s1918 + $0x20] sm:$0xf]
        %v2093 = vld [vmem:[%s1918 + $0x24] sm:$0x1]
        %v2094 = vld [vmem:[%s1918 + $0x28] sm:$0xf]
        %v2095 = vld [vmem:[%s1918 + $0x2c] sm:$0x1]
        %v2096 = vld [vmem:[%s1918 + $0x30] sm:$0xf]
        %v2097 = vld [vmem:[%s1918 + $0x34] sm:$0x1]
        %v2098 = vld [vmem:[%s1918 + $0x38] sm:$0xf]
        %v2099 = vld [vmem:[%s1918 + $0x3c] sm:$0x1]
        %v2101 = vshrl.u32 %v2084, 16
        %v2103 = vrot.slane %v2101, 4
        %v2104 = vshll.u32 %v2084, 16
        %v2106 = vrot.slane %v2104, 5
        %v2107 = vor.u32 %v2103, %v2106
        %v2108 = vrot.slane %v2107, 4
        %v2110 = vshll.u32 %v2085, 16
        %v2112 = vrot.slane %v2110, 5
        %v2113 = vsel %vm437, %v2108, %v2112
        %v2115 = vshrl.u32 %v2086, 16
        %v2117 = vrot.slane %v2115, 4
        %v2118 = vshll.u32 %v2086, 16
        %v2120 = vrot.slane %v2118, 5
        %v2121 = vor.u32 %v2117, %v2120
        %v2122 = vrot.slane %v2121, 4
        %v2124 = vshll.u32 %v2087, 16
        %v2126 = vrot.slane %v2124, 5
        %v2127 = vsel %vm437, %v2122, %v2126
        %v2129 = vshrl.u32 %v2088, 16
        %v2131 = vrot.slane %v2129, 4
        %v2132 = vshll.u32 %v2088, 16
        %v2134 = vrot.slane %v2132, 5
        %v2135 = vor.u32 %v2131, %v2134
        %v2136 = vrot.slane %v2135, 4
        %v2138 = vshll.u32 %v2089, 16
        %v2140 = vrot.slane %v2138, 5
        %v2141 = vsel %vm437, %v2136, %v2140
        %v2143 = vshrl.u32 %v2090, 16
        %v2145 = vrot.slane %v2143, 4
        %v2146 = vshll.u32 %v2090, 16
        %v2148 = vrot.slane %v2146, 5
        %v2149 = vor.u32 %v2145, %v2148
        %v2150 = vrot.slane %v2149, 4
        %v2152 = vshll.u32 %v2091, 16
        %v2154 = vrot.slane %v2152, 5
        %v2155 = vsel %vm437, %v2150, %v2154
        %v2157 = vshrl.u32 %v2092, 16
        %v2159 = vrot.slane %v2157, 4
        %v2160 = vshll.u32 %v2092, 16
        %v2162 = vrot.slane %v2160, 5
        %v2163 = vor.u32 %v2159, %v2162
        %v2164 = vrot.slane %v2163, 4
        %v2166 = vshll.u32 %v2093, 16
        %v2168 = vrot.slane %v2166, 5
        %v2169 = vsel %vm437, %v2164, %v2168
        %v2171 = vshrl.u32 %v2094, 16
        %v2173 = vrot.slane %v2171, 4
        %v2174 = vshll.u32 %v2094, 16
        %v2176 = vrot.slane %v2174, 5
        %v2177 = vor.u32 %v2173, %v2176
        %v2178 = vrot.slane %v2177, 4
        %v2180 = vshll.u32 %v2095, 16
        %v2182 = vrot.slane %v2180, 5
        %v2183 = vsel %vm437, %v2178, %v2182
        %v2185 = vshrl.u32 %v2096, 16
        %v2187 = vrot.slane %v2185, 4
        %v2188 = vshll.u32 %v2096, 16
        %v2190 = vrot.slane %v2188, 5
        %v2191 = vor.u32 %v2187, %v2190
        %v2192 = vrot.slane %v2191, 4
        %v2194 = vshll.u32 %v2097, 16
        %v2196 = vrot.slane %v2194, 5
        %v2197 = vsel %vm437, %v2192, %v2196
        %v2199 = vshrl.u32 %v2098, 16
        %v2201 = vrot.slane %v2199, 4
        %v2202 = vshll.u32 %v2098, 16
        %v2204 = vrot.slane %v2202, 5
        %v2205 = vor.u32 %v2201, %v2204
        %v2206 = vrot.slane %v2205, 4
        %v2208 = vshll.u32 %v2099, 16
        %v2210 = vrot.slane %v2208, 5
        %v2211 = vsel %vm437, %v2206, %v2210
        %s2212 = scalar_lea.vmem %s264, 28
        %v2213 = vld [vmem:[%s2212] sm:$0x3]
        %v2214 = vunpack.c.l.b16 %v2113
        %v2215 = vunpack.c.l.b16 %v2127
        %v2216 = vunpack.c.l.b16 %v2141
        %v2217 = vunpack.c.l.b16 %v2155
        %v2218 = vunpack.c.l.b16 %v2169
        %v2219 = vunpack.c.l.b16 %v2183
        %v2220 = vunpack.c.l.b16 %v2197
        %v2221 = vunpack.c.l.b16 %v2211
        %v2222 = vpack.c.b16 %v2215, %v2214
        %v2223 = vpack.c.b16 %v2217, %v2216
        %v2224 = vpack.c.b16 %v2219, %v2218
        %v2225 = vpack.c.b16 %v2221, %v2220
        %v2227 = vsel %vm309, %v2222, 0
        %v2230 = vsel %vm309, %v2223, 0
        %v2233 = vsel %vm309, %v2224, 0
        %v2236 = vsel %vm309, %v2225, 0
        %v2239 = vsel %vm322, %v2213, 0
        %2241 = vmatpush.bf16.msra.mxu0 0
        %2242 = vmatpush.bf16.msra.mxu0 0
        %2243 = vmatpush.bf16.msra.mxu0 0
        %2244 = vmatpush.bf16.msra.mxu0 0
        %2245 = vmatpush.bf16.msra.mxu0 0
        %2246 = vmatpush.bf16.msra.mxu0 0
        %2247 = vmatpush.bf16.msra.mxu0 0
        %2248 = vmatpush.bf16.msra.mxu0 %v2239
        %2249 = vmatmul.bf16.gmra.mxu0 %v2227
        %v2250 = vpop.f32.mrf.mxu0
        %v2251 = vadd.f32 0.0, %v2250
        %v2252 = vpop.f32.mrf.mxu0
        %v2253 = vadd.f32 0.0, %v2252
        %2254 = vmatmul.bf16.gmra.mxu0 %v2230
        %v2255 = vpop.f32.mrf.mxu0
        %v2256 = vadd.f32 0.0, %v2255
        %v2257 = vpop.f32.mrf.mxu0
        %v2258 = vadd.f32 0.0, %v2257
        %2259 = vmatmul.bf16.gmra.mxu0 %v2233
        %v2260 = vpop.f32.mrf.mxu0
        %v2261 = vadd.f32 0.0, %v2260
        %v2262 = vpop.f32.mrf.mxu0
        %v2263 = vadd.f32 0.0, %v2262
        %2264 = vmatmul.bf16.gmra.mxu0 %v2236
        %v2265 = vpop.f32.mrf.mxu0
        %v2266 = vadd.f32 0.0, %v2265
        %v2267 = vpop.f32.mrf.mxu0
        %v2268 = vadd.f32 0.0, %v2267
        %2269 = vdwg.mxu0
        %v2270 = vadd.f32 %v2076, %v2251
        %v2271 = vadd.f32 %v2077, %v2253
        %v2272 = vadd.f32 %v2078, %v2256
        %v2273 = vadd.f32 %v2079, %v2258
        %v2274 = vadd.f32 %v2080, %v2261
        %v2275 = vadd.f32 %v2081, %v2263
        %v2276 = vadd.f32 %v2082, %v2266
        %v2277 = vadd.f32 %v2083, %v2268
        %v2278 = vld [vmem:[%s2001] sm:$0xf]
        %v2279 = vld [vmem:[%s2001 + $0x4] sm:$0x1]
        %v2280 = vld [vmem:[%s2001 + $0x8] sm:$0xf]
        %v2281 = vld [vmem:[%s2001 + $0xc] sm:$0x1]
        %v2282 = vld [vmem:[%s2001 + $0x10] sm:$0xf]
        %v2283 = vld [vmem:[%s2001 + $0x14] sm:$0x1]
        %v2284 = vld [vmem:[%s2001 + $0x18] sm:$0xf]
        %v2285 = vld [vmem:[%s2001 + $0x1c] sm:$0x1]
        %v2286 = vld [vmem:[%s2001 + $0x20] sm:$0xf]
        %v2287 = vld [vmem:[%s2001 + $0x24] sm:$0x1]
        %v2288 = vld [vmem:[%s2001 + $0x28] sm:$0xf]
        %v2289 = vld [vmem:[%s2001 + $0x2c] sm:$0x1]
        %v2290 = vld [vmem:[%s2001 + $0x30] sm:$0xf]
        %v2291 = vld [vmem:[%s2001 + $0x34] sm:$0x1]
        %v2292 = vld [vmem:[%s2001 + $0x38] sm:$0xf]
        %v2293 = vld [vmem:[%s2001 + $0x3c] sm:$0x1]
        %v2295 = vshrl.u32 %v2278, 16
        %v2297 = vrot.slane %v2295, 4
        %v2298 = vshll.u32 %v2278, 16
        %v2300 = vrot.slane %v2298, 5
        %v2301 = vor.u32 %v2297, %v2300
        %v2302 = vrot.slane %v2301, 4
        %v2304 = vshll.u32 %v2279, 16
        %v2306 = vrot.slane %v2304, 5
        %v2307 = vsel %vm437, %v2302, %v2306
        %v2309 = vshrl.u32 %v2280, 16
        %v2311 = vrot.slane %v2309, 4
        %v2312 = vshll.u32 %v2280, 16
        %v2314 = vrot.slane %v2312, 5
        %v2315 = vor.u32 %v2311, %v2314
        %v2316 = vrot.slane %v2315, 4
        %v2318 = vshll.u32 %v2281, 16
        %v2320 = vrot.slane %v2318, 5
        %v2321 = vsel %vm437, %v2316, %v2320
        %v2323 = vshrl.u32 %v2282, 16
        %v2325 = vrot.slane %v2323, 4
        %v2326 = vshll.u32 %v2282, 16
        %v2328 = vrot.slane %v2326, 5
        %v2329 = vor.u32 %v2325, %v2328
        %v2330 = vrot.slane %v2329, 4
        %v2332 = vshll.u32 %v2283, 16
        %v2334 = vrot.slane %v2332, 5
        %v2335 = vsel %vm437, %v2330, %v2334
        %v2337 = vshrl.u32 %v2284, 16
        %v2339 = vrot.slane %v2337, 4
        %v2340 = vshll.u32 %v2284, 16
        %v2342 = vrot.slane %v2340, 5
        %v2343 = vor.u32 %v2339, %v2342
        %v2344 = vrot.slane %v2343, 4
        %v2346 = vshll.u32 %v2285, 16
        %v2348 = vrot.slane %v2346, 5
        %v2349 = vsel %vm437, %v2344, %v2348
        %v2351 = vshrl.u32 %v2286, 16
        %v2353 = vrot.slane %v2351, 4
        %v2354 = vshll.u32 %v2286, 16
        %v2356 = vrot.slane %v2354, 5
        %v2357 = vor.u32 %v2353, %v2356
        %v2358 = vrot.slane %v2357, 4
        %v2360 = vshll.u32 %v2287, 16
        %v2362 = vrot.slane %v2360, 5
        %v2363 = vsel %vm437, %v2358, %v2362
        %v2365 = vshrl.u32 %v2288, 16
        %v2367 = vrot.slane %v2365, 4
        %v2368 = vshll.u32 %v2288, 16
        %v2370 = vrot.slane %v2368, 5
        %v2371 = vor.u32 %v2367, %v2370
        %v2372 = vrot.slane %v2371, 4
        %v2374 = vshll.u32 %v2289, 16
        %v2376 = vrot.slane %v2374, 5
        %v2377 = vsel %vm437, %v2372, %v2376
        %v2379 = vshrl.u32 %v2290, 16
        %v2381 = vrot.slane %v2379, 4
        %v2382 = vshll.u32 %v2290, 16
        %v2384 = vrot.slane %v2382, 5
        %v2385 = vor.u32 %v2381, %v2384
        %v2386 = vrot.slane %v2385, 4
        %v2388 = vshll.u32 %v2291, 16
        %v2390 = vrot.slane %v2388, 5
        %v2391 = vsel %vm437, %v2386, %v2390
        %v2393 = vshrl.u32 %v2292, 16
        %v2395 = vrot.slane %v2393, 4
        %v2396 = vshll.u32 %v2292, 16
        %v2398 = vrot.slane %v2396, 5
        %v2399 = vor.u32 %v2395, %v2398
        %v2400 = vrot.slane %v2399, 4
        %v2402 = vshll.u32 %v2293, 16
        %v2404 = vrot.slane %v2402, 5
        %v2405 = vsel %vm437, %v2400, %v2404
        %s2406 = scalar_lea.vmem %s264, 30
        %v2407 = vld [vmem:[%s2406] sm:$0x3]
        %v2408 = vunpack.c.l.b16 %v2307
        %v2409 = vunpack.c.l.b16 %v2321
        %v2410 = vunpack.c.l.b16 %v2335
        %v2411 = vunpack.c.l.b16 %v2349
        %v2412 = vunpack.c.l.b16 %v2363
        %v2413 = vunpack.c.l.b16 %v2377
        %v2414 = vunpack.c.l.b16 %v2391
        %v2415 = vunpack.c.l.b16 %v2405
        %v2416 = vpack.c.b16 %v2409, %v2408
        %v2417 = vpack.c.b16 %v2411, %v2410
        %v2418 = vpack.c.b16 %v2413, %v2412
        %v2419 = vpack.c.b16 %v2415, %v2414
        %v2421 = vsel %vm309, %v2416, 0
        %v2424 = vsel %vm309, %v2417, 0
        %v2427 = vsel %vm309, %v2418, 0
        %v2430 = vsel %vm309, %v2419, 0
        %v2433 = vsel %vm322, %v2407, 0
        %2435 = vmatpush.bf16.msra.mxu0 0
        %2436 = vmatpush.bf16.msra.mxu0 0
        %2437 = vmatpush.bf16.msra.mxu0 0
        %2438 = vmatpush.bf16.msra.mxu0 0
        %2439 = vmatpush.bf16.msra.mxu0 0
        %2440 = vmatpush.bf16.msra.mxu0 0
        %2441 = vmatpush.bf16.msra.mxu0 0
        %2442 = vmatpush.bf16.msra.mxu0 %v2433
        %2443 = vmatmul.bf16.gmra.mxu0 %v2421
        %v2444 = vpop.f32.mrf.mxu0
        %v2445 = vadd.f32 0.0, %v2444
        %v2446 = vpop.f32.mrf.mxu0
        %v2447 = vadd.f32 0.0, %v2446
        %2448 = vmatmul.bf16.gmra.mxu0 %v2424
        %v2449 = vpop.f32.mrf.mxu0
        %v2450 = vadd.f32 0.0, %v2449
        %v2451 = vpop.f32.mrf.mxu0
        %v2452 = vadd.f32 0.0, %v2451
        %2453 = vmatmul.bf16.gmra.mxu0 %v2427
        %v2454 = vpop.f32.mrf.mxu0
        %v2455 = vadd.f32 0.0, %v2454
        %v2456 = vpop.f32.mrf.mxu0
        %v2457 = vadd.f32 0.0, %v2456
        %2458 = vmatmul.bf16.gmra.mxu0 %v2430
        %v2459 = vpop.f32.mrf.mxu0
        %v2460 = vadd.f32 0.0, %v2459
        %v2461 = vpop.f32.mrf.mxu0
        %v2462 = vadd.f32 0.0, %v2461
        %2463 = vdwg.mxu0
        %v2464 = vadd.f32 %v2270, %v2445
        %v2465 = vadd.f32 %v2271, %v2447
        %v2466 = vadd.f32 %v2272, %v2450
        %v2467 = vadd.f32 %v2273, %v2452
        %v2468 = vadd.f32 %v2274, %v2455
        %v2469 = vadd.f32 %v2275, %v2457
        %v2470 = vadd.f32 %v2276, %v2460
        %v2471 = vadd.f32 %v2277, %v2462
        %v2472 = vpack.c.bf16 %v2464, %v2464
        %v2473 = vpack.c.bf16 %v2465, %v2465
        %v2474 = vpack.c.bf16 %v2466, %v2466
        %v2475 = vpack.c.bf16 %v2467, %v2467
        %v2476 = vpack.c.bf16 %v2468, %v2468
        %v2477 = vpack.c.bf16 %v2469, %v2469
        %v2478 = vpack.c.bf16 %v2470, %v2470
        %v2479 = vpack.c.bf16 %v2471, %v2471
        %2480 = vst [vmem:[%s241] sm:$0xf] %v2472
        %2481 = vst [vmem:[%s241 + $0x4] sm:$0xf] %v2473
        %2482 = vst [vmem:[%s241 + $0x8] sm:$0xf] %v2474
        %2483 = vst [vmem:[%s241 + $0xc] sm:$0xf] %v2475
        %2484 = vst [vmem:[%s241 + $0x10] sm:$0xf] %v2476
        %2485 = vst [vmem:[%s241 + $0x14] sm:$0xf] %v2477
        %2486 = vst [vmem:[%s241 + $0x18] sm:$0xf] %v2478
        %2487 = vst [vmem:[%s241 + $0x1c] sm:$0xf] %v2479
        %v2488 = vadd.f32 %v2464, %v2465
        %v2489 = vadd.f32 %v2488, %v2466
        %v2490 = vadd.f32 %v2489, %v2467
        %v2491 = vadd.f32 %v2490, %v2468
        %v2492 = vadd.f32 %v2491, %v2469
        %v2493 = vadd.f32 %v2492, %v2470
        %v2494 = vadd.f32 %v2493, %v2471
        %v2495 = vrot.slane %v2494, 4
        %v2496 = vadd.f32 %v2494, %v2495
        %v2497 = vrot.slane %v2496, 2
        %v2498 = vadd.f32 %v2496, %v2497
        %v2499 = vrot.slane %v2498, 1
        %v2500 = vadd.f32 %v2498, %v2499
        %2501 = vst [vmem:[%s247] sm:$0x1] %v2500
        %v2502 = vmul.f32 %v2464, %v2464
        %v2503 = vmul.f32 %v2465, %v2465
        %v2504 = vmul.f32 %v2466, %v2466
        %v2505 = vmul.f32 %v2467, %v2467
        %v2506 = vmul.f32 %v2468, %v2468
        %v2507 = vmul.f32 %v2469, %v2469
        %v2508 = vmul.f32 %v2470, %v2470
        %v2509 = vmul.f32 %v2471, %v2471
        %v2510 = vadd.f32 %v2502, %v2503
        %v2511 = vadd.f32 %v2510, %v2504
        %v2512 = vadd.f32 %v2511, %v2505
        %v2513 = vadd.f32 %v2512, %v2506
        %v2514 = vadd.f32 %v2513, %v2507
        %v2515 = vadd.f32 %v2514, %v2508
        %v2516 = vadd.f32 %v2515, %v2509
        %v2517 = vrot.slane %v2516, 4
        %v2518 = vadd.f32 %v2516, %v2517
        %v2519 = vrot.slane %v2518, 2
        %v2520 = vadd.f32 %v2518, %v2519
        %v2521 = vrot.slane %v2520, 1
        %v2522 = vadd.f32 %v2520, %v2521
        %2523 = vst [vmem:[%s253] sm:$0x1] %v2522
        %s2524 = sand.u32 %s105, 1
        %s2525 = scalar_lea.sflag [#allocation3], %s2524
        %s2526 = sand.u32 %s105, 1
        %s2527 = smul.addr %s2526, 32
        %s2528 = scalar_lea.vmem [#allocation2], %s2527
        %s2529 = sand.u32 %s22, 1
        %s2530 = scalar_lea.sflag [#allocation5], %s2529
        %s2531 = sand.u32 %s135, 1
        %s2532 = scalar_lea.vmem [#allocation4], %s2531
        %s2533 = sand.u32 %s22, 1
        %s2534 = scalar_lea.sflag [#allocation5], %s2533
        %s2535 = sand.u32 %s165, 1
        %s2536 = scalar_lea.vmem [#allocation6], %s2535
        // Predicated region
        $region29: #{tpu_custom_call.1} parent=27 // pred_check
          %p2537 = pneg %p115
        $region30: #{tpu_custom_call.1} parent=27 // pred_check_branch
          %2539 = sbr.rel (%p2537) target = $region32
        $region31: #{tpu_custom_call.1} parent=27 // pred_region
          %s2540 = smul.u32 8, %s29
          %2542 = vsyncadd %s2525, 0
          %s2543 = sadd.s32 %s27, %s2540
          %s2544 = smul.addr %s28, 8
          %s2545 = sadd.s32 %s2543, %s2544
          %s2546 = smul.addr %s2545, 4
          %s2547 = scalar_lea.hbm %s2, %s2546
          %s2548 = sshll.u32 %s2528, 4
          %s2549 = int_to_ptr.vmem [resolvable:$true] %s2548
          %s2550 = sshll.u32 %s2547, 4
          %s2551 = int_to_ptr.hbm [resolvable:$true] %s2550
          %2556 = dma.vmem_to_hbm [thread:$0]  %s2549, 512, %s2551, %s2525, 64, 64, 4
        $region32: #{tpu_custom_call.1} parent=27 // pred_fallthru
          _
        // Predicated region
        $region33: #{tpu_custom_call.1} parent=27 // pred_check
          %p2557 = pneg %p145
        $region34: #{tpu_custom_call.1} parent=27 // pred_check_branch
          %2559 = sbr.rel (%p2557) target = $region36
        $region35: #{tpu_custom_call.1} parent=27 // pred_region
          %s2560 = sadd.s32 %s28, %s29
          %2562 = vsyncadd %s2530, 0
          %s2563 = sadd.s32 %s27, %s2560
          %s2564 = scalar_lea.hbm %s3, %s2563
          %s2566 = sshll.u32 %s2532, 4
          %s2567 = int_to_ptr.vmem [resolvable:$true] %s2566
          %s2568 = sshll.u32 %s2564, 4
          %s2569 = int_to_ptr.hbm [resolvable:$true] %s2568
          %2571 = dma.vmem_to_hbm [thread:$0]  %s2567, 16, %s2569, %s2530
        $region36: #{tpu_custom_call.1} parent=27 // pred_fallthru
          _
        // Predicated region
        $region37: #{tpu_custom_call.1} parent=27 // pred_check
          %p2572 = pneg %p175
        $region38: #{tpu_custom_call.1} parent=27 // pred_check_branch
          %2574 = sbr.rel (%p2572) target = $region40
        $region39: #{tpu_custom_call.1} parent=27 // pred_region
          %s2575 = sadd.s32 %s28, %s29
          %2577 = vsyncadd %s2534, 0
          %s2578 = sadd.s32 %s27, %s2575
          %s2579 = scalar_lea.hbm %s4, %s2578
          %s2581 = sshll.u32 %s2536, 4
          %s2582 = int_to_ptr.vmem [resolvable:$true] %s2581
          %s2583 = sshll.u32 %s2579, 4
          %s2584 = int_to_ptr.hbm [resolvable:$true] %s2583
          %2586 = dma.vmem_to_hbm [thread:$0]  %s2582, 16, %s2584, %s2534
        $region40: #{tpu_custom_call.1} parent=27 // pred_fallthru
          _
      $region28: #{tpu_custom_call.1} parent=5 // pred_fallthru
        _
      %p2587 = scmp.le.s32.totalorder 2, %s17
      // Predicated region
      $region41: #{tpu_custom_call.1} parent=5 // pred_check
        %p2588 = pneg %p2587
      $region42: #{tpu_custom_call.1} parent=5 // pred_check_branch
        %2590 = sbr.rel (%p2588) target = $region44
      $region43: #{tpu_custom_call.1} parent=5 // pred_region
        %s2591 = ssub.s32 %s17, 2
        // Predicated region
        $region45: #{tpu_custom_call.1} parent=43 // pred_check
          %p2592 = pneg %p121
        $region46: #{tpu_custom_call.1} parent=43 // pred_check_branch
          %2594 = sbr.rel (%p2592) target = $region48
        $region47: #{tpu_custom_call.1} parent=43 // pred_region
          %s2595 = sand.u32 %s106, 1
          %s2596 = scalar_lea.sflag [#allocation3], %s2595
          %s2597 = sand.u32 %s106, 1
          %s2598 = smul.addr %s2597, 32
          %s2599 = scalar_lea.vmem [#allocation2], %s2598
          %2601 = dma.done %s2596, 512
        $region48: #{tpu_custom_call.1} parent=43 // pred_fallthru
          _
        // Predicated region
        $region49: #{tpu_custom_call.1} parent=43 // pred_check
          %p2602 = pneg %p151
        $region50: #{tpu_custom_call.1} parent=43 // pred_check_branch
          %2604 = sbr.rel (%p2602) target = $region52
        $region51: #{tpu_custom_call.1} parent=43 // pred_region
          %s2605 = sand.u32 %s23, 1
          %s2606 = scalar_lea.sflag [#allocation5], %s2605
          %s2607 = sand.u32 %s136, 1
          %s2608 = scalar_lea.vmem [#allocation4], %s2607
          %2610 = dma.done %s2606, 16
        $region52: #{tpu_custom_call.1} parent=43 // pred_fallthru
          _
        // Predicated region
        $region53: #{tpu_custom_call.1} parent=43 // pred_check
          %p2611 = pneg %p181
        $region54: #{tpu_custom_call.1} parent=43 // pred_check_branch
          %2613 = sbr.rel (%p2611) target = $region56
        $region55: #{tpu_custom_call.1} parent=43 // pred_region
          %s2614 = sand.u32 %s23, 1
          %s2615 = scalar_lea.sflag [#allocation5], %s2614
          %s2616 = sand.u32 %s166, 1
          %s2617 = scalar_lea.vmem [#allocation6], %s2616
          %2619 = dma.done %s2615, 16
        $region56: #{tpu_custom_call.1} parent=43 // pred_fallthru
          _
      $region44: #{tpu_custom_call.1} parent=5 // pred_fallthru
        _
    $region6: #{tpu_custom_call.1} parent=1 // loop_footer
      %s21 = sadd.s32 1, %s17
    $region7: #{tpu_custom_call.1} parent=1 // loop_footer_branch
      %16 = sbr.rel target = $region3
    $region8: #{tpu_custom_call.1} parent=1 // loop_exit
      _
    %2620 = vsyncpa [#allocation3], 1
    %s2621 = scalar_lea.sflag [#allocation3], 1
    %2622 = vsyncpa %s2621, 1
    %2623 = vsyncpa [#allocation5], 1
    %s2624 = scalar_lea.sflag [#allocation5], 1
    %2625 = vsyncpa %s2624, 1

</llo_original>
